<compile_context>
chip_gen: v7x
topology: tpu7x:2x2x1
jax: 0.10.0
libtpu: 0.0.40
codegen_flags: <defaults>
</compile_context>

<pallas_src>
import jax
import jax.numpy as jnp
from jax import lax
from jax.experimental import pallas as pl
from jax.experimental.pallas import tpu as pltpu


# --------------------------------------------------------------------------------------
# Kernels
# --------------------------------------------------------------------------------------
def _endpoint_kernel(h_ref, w1se_ref, b1se_ref, w2s_ref, b2s_ref, w2e_ref, b2e_ref,
                     wo1a_ref, wo1b_ref, ms_ref, me_ref):
    """Per-batch: endpoint MLPs + first out_project Linear pushed BEFORE the gather.

    m_s = relu(project_start(h)) @ Wo1[:D]   -> (L, 4D)
    m_e = relu(project_end(h))   @ Wo1[D:]   -> (L, 4D)
    """
    f32 = jnp.float32
    bf16 = jnp.bfloat16
    H4 = w2s_ref.shape[0]                        # 4*D

    hb = h_ref[0].astype(bf16)                   # (L, D)

    # Fused first layers of project_start / project_end: one (L, D) @ (D, 8D) dot.
    mid = jnp.dot(hb, w1se_ref[...], preferred_element_type=f32) + b1se_ref[...]
    mid = jnp.maximum(mid, 0.0).astype(bf16)     # (L, 8D); Dropout = identity (eval)
    mid_s = mid[:, :H4]
    mid_e = mid[:, H4:]

    start_rep = jnp.dot(mid_s, w2s_ref[...], preferred_element_type=f32) + b2s_ref[...]
    end_rep = jnp.dot(mid_e, w2e_ref[...], preferred_element_type=f32) + b2e_ref[...]

    # ReLU on L rows (not S = L*max_width rows) — commutes with the row gather.
    sr = jnp.maximum(start_rep, 0.0).astype(bf16)
    er = jnp.maximum(end_rep, 0.0).astype(bf16)

    ms_ref[0] = jnp.dot(sr, wo1a_ref[...], preferred_element_type=f32).astype(bf16)
    me_ref[0] = jnp.dot(er, wo1b_ref[...], preferred_element_type=f32).astype(bf16)


def _span_kernel(idx_ref, ms_ref, me_ref, bo1_ref, wo2_ref, bo2_ref, o_ref):
    """Per (batch, span-tile): one-hot gather of m_s/m_e rows + out_project tail."""
    f32 = jnp.float32
    bf16 = jnp.bfloat16

    idx = idx_ref[0]                             # (TS, 2) int32, already clamped to [0, L)
    m_s = ms_ref[0]                              # (L, 4D) bf16
    m_e = me_ref[0]                              # (L, 4D) bf16
    TS = idx.shape[0]
    L = m_s.shape[0]

    # One-hot row gather as an MXU matmul; bf16 one-hots (0/1 exact in bf16).
    pos = lax.broadcasted_iota(jnp.int32, (TS, L), 1)
    oh_s = (idx[:, 0:1] == pos).astype(bf16)     # (TS, L)
    oh_e = (idx[:, 1:2] == pos).astype(bf16)     # (TS, L)

    mid = (jnp.dot(oh_s, m_s, preferred_element_type=f32)
           + jnp.dot(oh_e, m_e, preferred_element_type=f32)
           + bo1_ref[...])                       # (TS, 4D) f32
    mid = jnp.maximum(mid, 0.0).astype(bf16)     # Dropout = identity (eval)
    out = jnp.dot(mid, wo2_ref[...], preferred_element_type=f32) + bo2_ref[...]
    o_ref[0] = out.astype(o_ref.dtype)           # (TS, D)


# --------------------------------------------------------------------------------------
# Wrapper
# --------------------------------------------------------------------------------------
def _pick_span_tile(S, target=256):
    """Largest multiple-of-8 divisor of S that is <= target (or S itself if S <= target)."""
    if S <= target:
        return S
    start = target - (target % 8)
    for ts in range(start, 7, -8):
        if S % ts == 0:
            return ts
    return S  # no aligned divisor found: fall back to a single span tile


def _prepare_params(params, D):
    """Pack f32 params into the kernel layout (bf16 weights, f32 biases, fused layers)."""
    (w1s, b1s, w2s, b2s, w1e, b1e, w2e, b2e, wo1, bo1, wo2, bo2) = params
    bf16 = jnp.bfloat16
    w1se = jnp.concatenate([w1s, w1e], axis=1).astype(bf16)   # (D, 8D)  fused first layers
    b1se = jnp.concatenate([b1s, b1e], axis=1)                # (1, 8D)  f32
    return (w1se, b1se,
            w2s.astype(bf16), b2s, w2e.astype(bf16), b2e,
            wo1[:D].astype(bf16), wo1[D:].astype(bf16),       # split (2D, 4D) out_project W1
            bo1, wo2.astype(bf16), bo2)


def _vmem_limit(need_bytes):
    return int(min(100 << 20, max(32 << 20, need_bytes + (8 << 20))))


def _nbytes(*arrs):
    return sum(int(a.size) * a.dtype.itemsize for a in arrs)


def _forward(h, idx, prep, L, D, S, TS, single_buffer_weights):
    (w1se, b1se, w2s, b2s, w2e, b2e, wo1a, wo1b, bo1, wo2, bo2) = prep
    B = h.shape[0]
    H4 = 4 * D
    buf_w = 1 if single_buffer_weights else 2

    def const_spec(arr):
        zeros = (0,) * arr.ndim
        imap = lambda *_: zeros
        if single_buffer_weights:
            # Constant index_map across the grid -> single-buffer the block.
            return pl.BlockSpec(arr.shape, imap, pipeline_mode=pl.Buffered(1))
        return pl.BlockSpec(arr.shape, imap)

    # ---------------- stage 1: endpoint MLPs + first out_project matmul ----------------
    consts1 = (w1se, b1se, w2s, b2s, w2e, b2e, wo1a, wo1b)
    need1 = (_nbytes(*consts1) * buf_w                 # weights/biases
             + 2 * (L * D * 4)                         # h block (double buffered)
             + 2 * 2 * (L * H4 * 2)                    # two bf16 outputs (double buffered)
             + L * (8 * D) * 6 + 2 * (L * D * 4 + L * H4 * 4))   # rough temporaries
    grid1 = pltpu.PrefetchScalarGridSpec(
        num_scalar_prefetch=0,
        grid=(B,),
        in_specs=[pl.BlockSpec((1, L, D), lambda b: (b, 0, 0))]
                 + [const_spec(a) for a in consts1],
        out_specs=[pl.BlockSpec((1, L, H4), lambda b: (b, 0, 0)),
                   pl.BlockSpec((1, L, H4), lambda b: (b, 0, 0))],
    )
    m_s, m_e = pl.pallas_call(
        _endpoint_kernel,
        out_shape=(jax.ShapeDtypeStruct((B, L, H4), jnp.bfloat16),
                   jax.ShapeDtypeStruct((B, L, H4), jnp.bfloat16)),
        grid_spec=grid1,
        compiler_params=pltpu.CompilerParams(
            dimension_semantics=("parallel",),
            vmem_limit_bytes=_vmem_limit(need1)),
    )(h, *consts1)

    # ---------------- stage 2: gather + out_project tail, tiled over spans --------------
    consts2 = (bo1, wo2, bo2)
    n_t = S // TS
    need2 = (_nbytes(*consts2) * buf_w
             + 2 * (TS * 2 * 4 + 2 * (L * H4 * 2) + TS * D * 4)   # idx + m_s/m_e + out blocks
             + 2 * TS * L * 2 + 3 * TS * H4 * 4 + TS * D * 4)     # rough temporaries
    grid2 = pltpu.PrefetchScalarGridSpec(
        num_scalar_prefetch=0,
        grid=(B, n_t),
        in_specs=[pl.BlockSpec((1, TS, 2), lambda b, t: (b, t, 0)),
                  pl.BlockSpec((1, L, H4), lambda b, t: (b, 0, 0)),
                  pl.BlockSpec((1, L, H4), lambda b, t: (b, 0, 0))]
                 + [const_spec(a) for a in consts2],
        out_specs=pl.BlockSpec((1, TS, D), lambda b, t: (b, t, 0)),
    )
    out = pl.pallas_call(
        _span_kernel,
        out_shape=jax.ShapeDtypeStruct((B, S, D), jnp.float32),
        grid_spec=grid2,
        compiler_params=pltpu.CompilerParams(
            dimension_semantics=("parallel", "parallel"),
            vmem_limit_bytes=_vmem_limit(need2)),
    )(idx, m_s, m_e, *consts2)

    return jax.block_until_ready(out)


def span_marker_v0(h, span_idx, params, max_width, *, span_tile=256):
    """h: (B, L, D) f32; span_idx: (B, L*max_width, 2) int -> (B, L, max_width, D) f32."""
    B, L, D = h.shape
    S = span_idx.shape[1]
    assert S == L * max_width
    TS = _pick_span_tile(S, span_tile)

    # Clamp indices (handles -1 padding; matches take_along_axis / valid torch.gather use).
    idx = jnp.clip(span_idx.astype(jnp.int32), 0, L - 1)
    prep = _prepare_params(params, D)

    try:
        out = _forward(h, idx, prep, L, D, S, TS, single_buffer_weights=True)
    except Exception:
        # TODO(synk): pl.Buffered(1) single-buffering not available in this JAX build;
        # fall back to default double-buffered weight blocks (costs 2x weight VMEM).
        out = _forward(h, idx, prep, L, D, S, TS, single_buffer_weights=False)

    return out.reshape(B, L, max_width, D)


# --------------------------------------------------------------------------------------
# Synthetic params + pure-JAX reference (mirrors the kernel's bf16 matmul rounding)
# --------------------------------------------------------------------------------------
def _init_params(key, D):
    """Deterministic f32 init. Linear weights stored (in, out); bias (1, out)."""
    def linear(k, din, dout):
        kw, kb = jax.random.split(k)
        w = jax.random.normal(kw, (din, dout), jnp.float32) / jnp.sqrt(jnp.float32(din))
        b = 0.01 * jax.random.normal(kb, (1, dout), jnp.float32)
        return w, b

    ks = jax.random.split(key, 6)
    w1s, b1s = linear(ks[0], D, 4 * D)       # project_start: Linear(D, 4D)
    w2s, b2s = linear(ks[1], 4 * D, D)       #                Linear(4D, D)
    w1e, b1e = linear(ks[2], D, 4 * D)       # project_end
    w2e, b2e = linear(ks[3], 4 * D, D)
    wo1, bo1 = linear(ks[4], 2 * D, 4 * D)   # out_project: Linear(2D, 4D)
    wo2, bo2 = linear(ks[5], 4 * D, D)       #              Linear(4D, D)
    return (w1s, b1s, w2s, b2s, w1e, b1e, w2e, b2e, wo1, bo1, wo2, bo2)


def _reference(h, span_idx, params, max_width):
    """Replica of the PyTorch forward (eval mode) with the same bf16/f32 mixed precision."""
    B, L, D = h.shape
    H4 = 4 * D
    f32, bf16 = jnp.float32, jnp.bfloat16
    (w1se, b1se, w2s, b2s, w2e, b2e, wo1a, wo1b, bo1, wo2, bo2) = _prepare_params(params, D)

    hb = h.astype(bf16)
    mid = jnp.maximum(jnp.dot(hb, w1se, preferred_element_type=f32) + b1se, 0.0).astype(bf16)
    mid_s, mid_e = mid[..., :H4], mid[..., H4:]
    sr = jnp.maximum(jnp.dot(mid_s, w2s, preferred_element_type=f32) + b2s, 0.0).astype(bf16)
    er = jnp.maximum(jnp.dot(mid_e, w2e, preferred_element_type=f32) + b2e, 0.0).astype(bf16)
    m_s = jnp.dot(sr, wo1a, preferred_element_type=f32).astype(bf16)
    m_e = jnp.dot(er, wo1b, preferred_element_type=f32).astype(bf16)

    idx = jnp.clip(span_idx.astype(jnp.int32), 0, L - 1)

    def gather(x, ind):   # torch.gather(x, 1, ind.unsqueeze(2).expand(-1,-1,K))
        ind3 = jnp.broadcast_to(ind[:, :, None], ind.shape + (x.shape[-1],))
        return jnp.take_along_axis(x, ind3, axis=1)

    sm = gather(m_s, idx[:, :, 0]).astype(f32)
    em = gather(m_e, idx[:, :, 1]).astype(f32)
    mid2 = jnp.maximum(sm + em + bo1, 0.0).astype(bf16)
    out = jnp.dot(mid2, wo2, preferred_element_type=f32) + bo2
    return out.reshape(B, L, max_width, D).astype(f32)


# --------------------------------------------------------------------------------------
if __name__ == "__main__":
    B, L, D, MAX_W = 2, 8, 32, 4
    S = L * MAX_W

    h = jax.random.normal(jax.random.PRNGKey(0), (B, L, D), jnp.float32)

    # span_idx[b, l*MAX_W + w] = (l, min(l + w, L - 1)), the GLiNER span enumeration.
    starts = jnp.repeat(jnp.arange(L, dtype=jnp.int32), MAX_W)
    widths = jnp.tile(jnp.arange(MAX_W, dtype=jnp.int32), L)
    ends = jnp.clip(starts + widths, 0, L - 1)
    span_idx = jnp.broadcast_to(jnp.stack([starts, ends], axis=-1)[None], (B, S, 2))

    params = _init_params(jax.random.PRNGKey(42), D)

    out = span_marker_v0(h, span_idx, params, MAX_W)
    out = jax.block_until_ready(out)
    assert out.shape == (B, L, MAX_W, D), out.shape

    ref = jax.block_until_ready(_reference(h, span_idx, params, MAX_W))
    max_err = float(jnp.max(jnp.abs(out - ref)))
    assert jnp.allclose(out, ref, rtol=2e-3, atol=2e-3), max_err

    # TODO(synk): nn.Dropout(p=0.4) is a training-time op; it is the identity here (eval mode).
    print("KERNEL_OK")
</pallas_src>

<mosaic_0001>
module attributes {stable_mosaic.version = 11 : i64} {
  func.func @_endpoint_kernel(%arg0: i32, %arg1: memref<1x8x32xf32, #tpu.memory_space<vmem>>, %arg2: memref<32x256xbf16, #tpu.memory_space<vmem>>, %arg3: memref<1x256xf32, #tpu.memory_space<vmem>>, %arg4: memref<128x32xbf16, #tpu.memory_space<vmem>>, %arg5: memref<1x32xf32, #tpu.memory_space<vmem>>, %arg6: memref<128x32xbf16, #tpu.memory_space<vmem>>, %arg7: memref<1x32xf32, #tpu.memory_space<vmem>>, %arg8: memref<32x128xbf16, #tpu.memory_space<vmem>>, %arg9: memref<32x128xbf16, #tpu.memory_space<vmem>>, %arg10: memref<1x8x128xbf16, #tpu.memory_space<vmem>>, %arg11: memref<1x8x128xbf16, #tpu.memory_space<vmem>>) attributes {dimension_semantics = [#tpu.dimension_semantics<parallel>], iteration_bounds = array<i64: 2>, scalar_prefetch = 0 : i64, scratch_operands = 0 : i64, tpu.core_type = #tpu.core_type<tc>, window_params = [{transform_indices = @transform_0, window_bounds = array<i64: 1, 8, 32>}, {pipeline_mode = #tpu.pipeline_mode<synchronous>, transform_indices = @transform_1, window_bounds = array<i64: 32, 256>}, {pipeline_mode = #tpu.pipeline_mode<synchronous>, transform_indices = @transform_2, window_bounds = array<i64: 1, 256>}, {pipeline_mode = #tpu.pipeline_mode<synchronous>, transform_indices = @transform_3, window_bounds = array<i64: 128, 32>}, {pipeline_mode = #tpu.pipeline_mode<synchronous>, transform_indices = @transform_4, window_bounds = array<i64: 1, 32>}, {pipeline_mode = #tpu.pipeline_mode<synchronous>, transform_indices = @transform_5, window_bounds = array<i64: 128, 32>}, {pipeline_mode = #tpu.pipeline_mode<synchronous>, transform_indices = @transform_6, window_bounds = array<i64: 1, 32>}, {pipeline_mode = #tpu.pipeline_mode<synchronous>, transform_indices = @transform_7, window_bounds = array<i64: 32, 128>}, {pipeline_mode = #tpu.pipeline_mode<synchronous>, transform_indices = @transform_8, window_bounds = array<i64: 32, 128>}, {transform_indices = @transform_9, window_bounds = array<i64: 1, 8, 128>}, {transform_indices = @transform_10, window_bounds = array<i64: 1, 8, 128>}]} {
    %c0 = arith.constant 0 : index
    %c0_0 = arith.constant 0 : index
    %c0_1 = arith.constant 0 : index
    %0 = vector.load %arg1[%c0, %c0_0, %c0_1] : memref<1x8x32xf32, #tpu.memory_space<vmem>>, vector<1x8x32xf32>
    %1 = vector.shape_cast %0 : vector<1x8x32xf32> to vector<8x32xf32>
    %2 = arith.truncf %1 : vector<8x32xf32> to vector<8x32xbf16>
    %c0_2 = arith.constant 0 : index
    %c0_3 = arith.constant 0 : index
    %3 = vector.load %arg2[%c0_2, %c0_3] : memref<32x256xbf16, #tpu.memory_space<vmem>>, vector<32x256xbf16>
    %cst = arith.constant dense<0.000000e+00> : vector<8x256xf32>
    %4 = tpu.matmul %2, %3, %cst {dimension_numbers = #tpu.dot_dimension_numbers<[1], [0], [0], [1], [0, 0, 1, 1], [], []>} : vector<8x32xbf16>, vector<32x256xbf16>, vector<8x256xf32> -> vector<8x256xf32>
    %c0_4 = arith.constant 0 : index
    %c0_5 = arith.constant 0 : index
    %5 = vector.load %arg3[%c0_4, %c0_5] : memref<1x256xf32, #tpu.memory_space<vmem>>, vector<1x256xf32>
    %6 = vector.broadcast %5 : vector<1x256xf32> to vector<8x256xf32>
    %7 = arith.addf %4, %6 : vector<8x256xf32>
    %cst_6 = arith.constant 0.000000e+00 : f32
    %8 = vector.broadcast %cst_6 : f32 to vector<8x256xf32>
    %9 = arith.maximumf %7, %8 : vector<8x256xf32>
    %10 = arith.truncf %9 : vector<8x256xf32> to vector<8x256xbf16>
    %11 = vector.extract_strided_slice %10 {offsets = [0, 0], sizes = [8, 128], strides = [1, 1]} : vector<8x256xbf16> to vector<8x128xbf16>
    %12 = vector.extract_strided_slice %10 {offsets = [0, 128], sizes = [8, 128], strides = [1, 1]} : vector<8x256xbf16> to vector<8x128xbf16>
    %c0_7 = arith.constant 0 : index
    %c0_8 = arith.constant 0 : index
    %13 = vector.load %arg4[%c0_7, %c0_8] : memref<128x32xbf16, #tpu.memory_space<vmem>>, vector<128x32xbf16>
    %cst_9 = arith.constant dense<0.000000e+00> : vector<8x32xf32>
    %14 = tpu.matmul %11, %13, %cst_9 {dimension_numbers = #tpu.dot_dimension_numbers<[1], [0], [0], [1], [0, 0, 1, 1], [], []>} : vector<8x128xbf16>, vector<128x32xbf16>, vector<8x32xf32> -> vector<8x32xf32>
    %c0_10 = arith.constant 0 : index
    %c0_11 = arith.constant 0 : index
    %15 = vector.load %arg5[%c0_10, %c0_11] : memref<1x32xf32, #tpu.memory_space<vmem>>, vector<1x32xf32>
    %16 = vector.broadcast %15 : vector<1x32xf32> to vector<8x32xf32>
    %17 = arith.addf %14, %16 : vector<8x32xf32>
    %c0_12 = arith.constant 0 : index
    %c0_13 = arith.constant 0 : index
    %18 = vector.load %arg6[%c0_12, %c0_13] : memref<128x32xbf16, #tpu.memory_space<vmem>>, vector<128x32xbf16>
    %cst_14 = arith.constant dense<0.000000e+00> : vector<8x32xf32>
    %19 = tpu.matmul %12, %18, %cst_14 {dimension_numbers = #tpu.dot_dimension_numbers<[1], [0], [0], [1], [0, 0, 1, 1], [], []>} : vector<8x128xbf16>, vector<128x32xbf16>, vector<8x32xf32> -> vector<8x32xf32>
    %c0_15 = arith.constant 0 : index
    %c0_16 = arith.constant 0 : index
    %20 = vector.load %arg7[%c0_15, %c0_16] : memref<1x32xf32, #tpu.memory_space<vmem>>, vector<1x32xf32>
    %21 = vector.broadcast %20 : vector<1x32xf32> to vector<8x32xf32>
    %22 = arith.addf %19, %21 : vector<8x32xf32>
    %cst_17 = arith.constant 0.000000e+00 : f32
    %23 = vector.broadcast %cst_17 : f32 to vector<8x32xf32>
    %24 = arith.maximumf %17, %23 : vector<8x32xf32>
    %25 = arith.truncf %24 : vector<8x32xf32> to vector<8x32xbf16>
    %cst_18 = arith.constant 0.000000e+00 : f32
    %26 = vector.broadcast %cst_18 : f32 to vector<8x32xf32>
    %27 = arith.maximumf %22, %26 : vector<8x32xf32>
    %28 = arith.truncf %27 : vector<8x32xf32> to vector<8x32xbf16>
    %c0_19 = arith.constant 0 : index
    %c0_20 = arith.constant 0 : index
    %29 = vector.load %arg8[%c0_19, %c0_20] : memref<32x128xbf16, #tpu.memory_space<vmem>>, vector<32x128xbf16>
    %cst_21 = arith.constant dense<0.000000e+00> : vector<8x128xf32>
    %30 = tpu.matmul %25, %29, %cst_21 {dimension_numbers = #tpu.dot_dimension_numbers<[1], [0], [0], [1], [0, 0, 1, 1], [], []>} : vector<8x32xbf16>, vector<32x128xbf16>, vector<8x128xf32> -> vector<8x128xf32>
    %31 = arith.truncf %30 : vector<8x128xf32> to vector<8x128xbf16>
    %c0_22 = arith.constant 0 : index
    %c0_23 = arith.constant 0 : index
    %c0_24 = arith.constant 0 : index
    %32 = vector.load %arg10[%c0_22, %c0_23, %c0_24] : memref<1x8x128xbf16, #tpu.memory_space<vmem>>, vector<1x8x128xbf16>
    %33 = vector.shape_cast %32 : vector<1x8x128xbf16> to vector<8x128xbf16>
    %34 = vector.shape_cast %31 : vector<8x128xbf16> to vector<1x8x128xbf16>
    tpu.vector_store %arg10[%c0_22, %c0_23, %c0_24], %34 {strides = array<i32>} : memref<1x8x128xbf16, #tpu.memory_space<vmem>>, vector<1x8x128xbf16>,
    %c0_25 = arith.constant 0 : index
    %c0_26 = arith.constant 0 : index
    %35 = vector.load %arg9[%c0_25, %c0_26] : memref<32x128xbf16, #tpu.memory_space<vmem>>, vector<32x128xbf16>
    %cst_27 = arith.constant dense<0.000000e+00> : vector<8x128xf32>
    %36 = tpu.matmul %28, %35, %cst_27 {dimension_numbers = #tpu.dot_dimension_numbers<[1], [0], [0], [1], [0, 0, 1, 1], [], []>} : vector<8x32xbf16>, vector<32x128xbf16>, vector<8x128xf32> -> vector<8x128xf32>
    %37 = arith.truncf %36 : vector<8x128xf32> to vector<8x128xbf16>
    %c0_28 = arith.constant 0 : index
    %c0_29 = arith.constant 0 : index
    %c0_30 = arith.constant 0 : index
    %38 = vector.load %arg11[%c0_28, %c0_29, %c0_30] : memref<1x8x128xbf16, #tpu.memory_space<vmem>>, vector<1x8x128xbf16>
    %39 = vector.shape_cast %38 : vector<1x8x128xbf16> to vector<8x128xbf16>
    %40 = vector.shape_cast %37 : vector<8x128xbf16> to vector<1x8x128xbf16>
    tpu.vector_store %arg11[%c0_28, %c0_29, %c0_30], %40 {strides = array<i32>} : memref<1x8x128xbf16, #tpu.memory_space<vmem>>, vector<1x8x128xbf16>,
    return
  }
  func.func @transform_0(%arg0: i32) -> (i32, i32, i32) {
    %c0_i32 = arith.constant 0 : i32
    %c0_i32_0 = arith.constant 0 : i32
    %c0_i32_1 = arith.constant 0 : i32
    return %arg0, %c0_i32, %c0_i32_0 : i32, i32, i32
  }
  func.func @transform_1(%arg0: i32) -> (i32, i32) {
    %c0_i32 = arith.constant 0 : i32
    %c0_i32_0 = arith.constant 0 : i32
    %c0_i32_1 = arith.constant 0 : i32
    return %c0_i32, %c0_i32_0 : i32, i32
  }
  func.func @transform_2(%arg0: i32) -> (i32, i32) {
    %c0_i32 = arith.constant 0 : i32
    %c0_i32_0 = arith.constant 0 : i32
    %c0_i32_1 = arith.constant 0 : i32
    return %c0_i32, %c0_i32_0 : i32, i32
  }
  func.func @transform_3(%arg0: i32) -> (i32, i32) {
    %c0_i32 = arith.constant 0 : i32
    %c0_i32_0 = arith.constant 0 : i32
    %c0_i32_1 = arith.constant 0 : i32
    return %c0_i32, %c0_i32_0 : i32, i32
  }
  func.func @transform_4(%arg0: i32) -> (i32, i32) {
    %c0_i32 = arith.constant 0 : i32
    %c0_i32_0 = arith.constant 0 : i32
    %c0_i32_1 = arith.constant 0 : i32
    return %c0_i32, %c0_i32_0 : i32, i32
  }
  func.func @transform_5(%arg0: i32) -> (i32, i32) {
    %c0_i32 = arith.constant 0 : i32
    %c0_i32_0 = arith.constant 0 : i32
    %c0_i32_1 = arith.constant 0 : i32
    return %c0_i32, %c0_i32_0 : i32, i32
  }
  func.func @transform_6(%arg0: i32) -> (i32, i32) {
    %c0_i32 = arith.constant 0 : i32
    %c0_i32_0 = arith.constant 0 : i32
    %c0_i32_1 = arith.constant 0 : i32
    return %c0_i32, %c0_i32_0 : i32, i32
  }
  func.func @transform_7(%arg0: i32) -> (i32, i32) {
    %c0_i32 = arith.constant 0 : i32
    %c0_i32_0 = arith.constant 0 : i32
    %c0_i32_1 = arith.constant 0 : i32
    return %c0_i32, %c0_i32_0 : i32, i32
  }
  func.func @transform_8(%arg0: i32) -> (i32, i32) {
    %c0_i32 = arith.constant 0 : i32
    %c0_i32_0 = arith.constant 0 : i32
    %c0_i32_1 = arith.constant 0 : i32
    return %c0_i32, %c0_i32_0 : i32, i32
  }
  func.func @transform_9(%arg0: i32) -> (i32, i32, i32) {
    %c0_i32 = arith.constant 0 : i32
    %c0_i32_0 = arith.constant 0 : i32
    %c0_i32_1 = arith.constant 0 : i32
    return %arg0, %c0_i32, %c0_i32_0 : i32, i32, i32
  }
  func.func @transform_10(%arg0: i32) -> (i32, i32, i32) {
    %c0_i32 = arith.constant 0 : i32
    %c0_i32_0 = arith.constant 0 : i32
    %c0_i32_1 = arith.constant 0 : i32
    return %arg0, %c0_i32, %c0_i32_0 : i32, i32, i32
  }
}

module attributes {stable_mosaic.version = 11 : i64} {
  func.func @_endpoint_kernel(%arg0: i32, %arg1: memref<1x8x32xf32, #tpu.memory_space<vmem>>, %arg2: memref<32x256xbf16, #tpu.memory_space<vmem>>, %arg3: memref<1x256xf32, #tpu.memory_space<vmem>>, %arg4: memref<128x32xbf16, #tpu.memory_space<vmem>>, %arg5: memref<1x32xf32, #tpu.memory_space<vmem>>, %arg6: memref<128x32xbf16, #tpu.memory_space<vmem>>, %arg7: memref<1x32xf32, #tpu.memory_space<vmem>>, %arg8: memref<32x128xbf16, #tpu.memory_space<vmem>>, %arg9: memref<32x128xbf16, #tpu.memory_space<vmem>>, %arg10: memref<1x8x128xbf16, #tpu.memory_space<vmem>>, %arg11: memref<1x8x128xbf16, #tpu.memory_space<vmem>>) attributes {dimension_semantics = [#tpu.dimension_semantics<parallel>], iteration_bounds = array<i64: 2>, scalar_prefetch = 0 : i64, scratch_operands = 0 : i64, tpu.core_type = #tpu.core_type<tc>, window_params = [{transform_indices = @transform_0, window_bounds = array<i64: 1, 8, 32>}, {pipeline_mode = #tpu.pipeline_mode<synchronous>, transform_indices = @transform_1, window_bounds = array<i64: 32, 256>}, {pipeline_mode = #tpu.pipeline_mode<synchronous>, transform_indices = @transform_2, window_bounds = array<i64: 1, 256>}, {pipeline_mode = #tpu.pipeline_mode<synchronous>, transform_indices = @transform_3, window_bounds = array<i64: 128, 32>}, {pipeline_mode = #tpu.pipeline_mode<synchronous>, transform_indices = @transform_4, window_bounds = array<i64: 1, 32>}, {pipeline_mode = #tpu.pipeline_mode<synchronous>, transform_indices = @transform_5, window_bounds = array<i64: 128, 32>}, {pipeline_mode = #tpu.pipeline_mode<synchronous>, transform_indices = @transform_6, window_bounds = array<i64: 1, 32>}, {pipeline_mode = #tpu.pipeline_mode<synchronous>, transform_indices = @transform_7, window_bounds = array<i64: 32, 128>}, {pipeline_mode = #tpu.pipeline_mode<synchronous>, transform_indices = @transform_8, window_bounds = array<i64: 32, 128>}, {transform_indices = @transform_9, window_bounds = array<i64: 1, 8, 128>}, {transform_indices = @transform_10, window_bounds = array<i64: 1, 8, 128>}]} {
    %c0 = arith.constant 0 : index
    %c0_0 = arith.constant 0 : index
    %c0_1 = arith.constant 0 : index
    %0 = vector.load %arg1[%c0, %c0_0, %c0_1] : memref<1x8x32xf32, #tpu.memory_space<vmem>>, vector<1x8x32xf32>
    %1 = vector.shape_cast %0 : vector<1x8x32xf32> to vector<8x32xf32>
    %2 = arith.truncf %1 : vector<8x32xf32> to vector<8x32xbf16>
    %c0_2 = arith.constant 0 : index
    %c0_3 = arith.constant 0 : index
    %3 = vector.load %arg2[%c0_2, %c0_3] : memref<32x256xbf16, #tpu.memory_space<vmem>>, vector<32x256xbf16>
    %cst = arith.constant dense<0.000000e+00> : vector<8x256xf32>
    %4 = tpu.matmul %2, %3, %cst {dimension_numbers = #tpu.dot_dimension_numbers<[1], [0], [0], [1], [0, 0, 1, 1], [], []>} : vector<8x32xbf16>, vector<32x256xbf16>, vector<8x256xf32> -> vector<8x256xf32>
    %c0_4 = arith.constant 0 : index
    %c0_5 = arith.constant 0 : index
    %5 = vector.load %arg3[%c0_4, %c0_5] : memref<1x256xf32, #tpu.memory_space<vmem>>, vector<1x256xf32>
    %6 = vector.broadcast %5 : vector<1x256xf32> to vector<8x256xf32>
    %7 = arith.addf %4, %6 : vector<8x256xf32>
    %cst_6 = arith.constant 0.000000e+00 : f32
    %8 = vector.broadcast %cst_6 : f32 to vector<8x256xf32>
    %9 = arith.maximumf %7, %8 : vector<8x256xf32>
    %10 = arith.truncf %9 : vector<8x256xf32> to vector<8x256xbf16>
    %11 = vector.extract_strided_slice %10 {offsets = [0, 0], sizes = [8, 128], strides = [1, 1]} : vector<8x256xbf16> to vector<8x128xbf16>
    %12 = vector.extract_strided_slice %10 {offsets = [0, 128], sizes = [8, 128], strides = [1, 1]} : vector<8x256xbf16> to vector<8x128xbf16>
    %c0_7 = arith.constant 0 : index
    %c0_8 = arith.constant 0 : index
    %13 = vector.load %arg4[%c0_7, %c0_8] : memref<128x32xbf16, #tpu.memory_space<vmem>>, vector<128x32xbf16>
    %cst_9 = arith.constant dense<0.000000e+00> : vector<8x32xf32>
    %14 = tpu.matmul %11, %13, %cst_9 {dimension_numbers = #tpu.dot_dimension_numbers<[1], [0], [0], [1], [0, 0, 1, 1], [], []>} : vector<8x128xbf16>, vector<128x32xbf16>, vector<8x32xf32> -> vector<8x32xf32>
    %c0_10 = arith.constant 0 : index
    %c0_11 = arith.constant 0 : index
    %15 = vector.load %arg5[%c0_10, %c0_11] : memref<1x32xf32, #tpu.memory_space<vmem>>, vector<1x32xf32>
    %16 = vector.broadcast %15 : vector<1x32xf32> to vector<8x32xf32>
    %17 = arith.addf %14, %16 : vector<8x32xf32>
    %c0_12 = arith.constant 0 : index
    %c0_13 = arith.constant 0 : index
    %18 = vector.load %arg6[%c0_12, %c0_13] : memref<128x32xbf16, #tpu.memory_space<vmem>>, vector<128x32xbf16>
    %cst_14 = arith.constant dense<0.000000e+00> : vector<8x32xf32>
    %19 = tpu.matmul %12, %18, %cst_14 {dimension_numbers = #tpu.dot_dimension_numbers<[1], [0], [0], [1], [0, 0, 1, 1], [], []>} : vector<8x128xbf16>, vector<128x32xbf16>, vector<8x32xf32> -> vector<8x32xf32>
    %c0_15 = arith.constant 0 : index
    %c0_16 = arith.constant 0 : index
    %20 = vector.load %arg7[%c0_15, %c0_16] : memref<1x32xf32, #tpu.memory_space<vmem>>, vector<1x32xf32>
    %21 = vector.broadcast %20 : vector<1x32xf32> to vector<8x32xf32>
    %22 = arith.addf %19, %21 : vector<8x32xf32>
    %cst_17 = arith.constant 0.000000e+00 : f32
    %23 = vector.broadcast %cst_17 : f32 to vector<8x32xf32>
    %24 = arith.maximumf %17, %23 : vector<8x32xf32>
    %25 = arith.truncf %24 : vector<8x32xf32> to vector<8x32xbf16>
    %cst_18 = arith.constant 0.000000e+00 : f32
    %26 = vector.broadcast %cst_18 : f32 to vector<8x32xf32>
    %27 = arith.maximumf %22, %26 : vector<8x32xf32>
    %28 = arith.truncf %27 : vector<8x32xf32> to vector<8x32xbf16>
    %c0_19 = arith.constant 0 : index
    %c0_20 = arith.constant 0 : index
    %29 = vector.load %arg8[%c0_19, %c0_20] : memref<32x128xbf16, #tpu.memory_space<vmem>>, vector<32x128xbf16>
    %cst_21 = arith.constant dense<0.000000e+00> : vector<8x128xf32>
    %30 = tpu.matmul %25, %29, %cst_21 {dimension_numbers = #tpu.dot_dimension_numbers<[1], [0], [0], [1], [0, 0, 1, 1], [], []>} : vector<8x32xbf16>, vector<32x128xbf16>, vector<8x128xf32> -> vector<8x128xf32>
    %31 = arith.truncf %30 : vector<8x128xf32> to vector<8x128xbf16>
    %c0_22 = arith.constant 0 : index
    %c0_23 = arith.constant 0 : index
    %c0_24 = arith.constant 0 : index
    %32 = vector.load %arg10[%c0_22, %c0_23, %c0_24] : memref<1x8x128xbf16, #tpu.memory_space<vmem>>, vector<1x8x128xbf16>
    %33 = vector.shape_cast %32 : vector<1x8x128xbf16> to vector<8x128xbf16>
    %34 = vector.shape_cast %31 : vector<8x128xbf16> to vector<1x8x128xbf16>
    tpu.vector_store %arg10[%c0_22, %c0_23, %c0_24], %34 {strides = array<i32>} : memref<1x8x128xbf16, #tpu.memory_space<vmem>>, vector<1x8x128xbf16>,
    %c0_25 = arith.constant 0 : index
    %c0_26 = arith.constant 0 : index
    %35 = vector.load %arg9[%c0_25, %c0_26] : memref<32x128xbf16, #tpu.memory_space<vmem>>, vector<32x128xbf16>
    %cst_27 = arith.constant dense<0.000000e+00> : vector<8x128xf32>
    %36 = tpu.matmul %28, %35, %cst_27 {dimension_numbers = #tpu.dot_dimension_numbers<[1], [0], [0], [1], [0, 0, 1, 1], [], []>} : vector<8x32xbf16>, vector<32x128xbf16>, vector<8x128xf32> -> vector<8x128xf32>
    %37 = arith.truncf %36 : vector<8x128xf32> to vector<8x128xbf16>
    %c0_28 = arith.constant 0 : index
    %c0_29 = arith.constant 0 : index
    %c0_30 = arith.constant 0 : index
    %38 = vector.load %arg11[%c0_28, %c0_29, %c0_30] : memref<1x8x128xbf16, #tpu.memory_space<vmem>>, vector<1x8x128xbf16>
    %39 = vector.shape_cast %38 : vector<1x8x128xbf16> to vector<8x128xbf16>
    %40 = vector.shape_cast %37 : vector<8x128xbf16> to vector<1x8x128xbf16>
    tpu.vector_store %arg11[%c0_28, %c0_29, %c0_30], %40 {strides = array<i32>} : memref<1x8x128xbf16, #tpu.memory_space<vmem>>, vector<1x8x128xbf16>,
    return
  }
  func.func @transform_0(%arg0: i32) -> (i32, i32, i32) {
    %c0_i32 = arith.constant 0 : i32
    %c0_i32_0 = arith.constant 0 : i32
    %c0_i32_1 = arith.constant 0 : i32
    return %arg0, %c0_i32, %c0_i32_0 : i32, i32, i32
  }
  func.func @transform_1(%arg0: i32) -> (i32, i32) {
    %c0_i32 = arith.constant 0 : i32
    %c0_i32_0 = arith.constant 0 : i32
    %c0_i32_1 = arith.constant 0 : i32
    return %c0_i32, %c0_i32_0 : i32, i32
  }
  func.func @transform_2(%arg0: i32) -> (i32, i32) {
    %c0_i32 = arith.constant 0 : i32
    %c0_i32_0 = arith.constant 0 : i32
    %c0_i32_1 = arith.constant 0 : i32
    return %c0_i32, %c0_i32_0 : i32, i32
  }
  func.func @transform_3(%arg0: i32) -> (i32, i32) {
    %c0_i32 = arith.constant 0 : i32
    %c0_i32_0 = arith.constant 0 : i32
    %c0_i32_1 = arith.constant 0 : i32
    return %c0_i32, %c0_i32_0 : i32, i32
  }
  func.func @transform_4(%arg0: i32) -> (i32, i32) {
    %c0_i32 = arith.constant 0 : i32
    %c0_i32_0 = arith.constant 0 : i32
    %c0_i32_1 = arith.constant 0 : i32
    return %c0_i32, %c0_i32_0 : i32, i32
  }
  func.func @transform_5(%arg0: i32) -> (i32, i32) {
    %c0_i32 = arith.constant 0 : i32
    %c0_i32_0 = arith.constant 0 : i32
    %c0_i32_1 = arith.constant 0 : i32
    return %c0_i32, %c0_i32_0 : i32, i32
  }
  func.func @transform_6(%arg0: i32) -> (i32, i32) {
    %c0_i32 = arith.constant 0 : i32
    %c0_i32_0 = arith.constant 0 : i32
    %c0_i32_1 = arith.constant 0 : i32
    return %c0_i32, %c0_i32_0 : i32, i32
  }
  func.func @transform_7(%arg0: i32) -> (i32, i32) {
    %c0_i32 = arith.constant 0 : i32
    %c0_i32_0 = arith.constant 0 : i32
    %c0_i32_1 = arith.constant 0 : i32
    return %c0_i32, %c0_i32_0 : i32, i32
  }
  func.func @transform_8(%arg0: i32) -> (i32, i32) {
    %c0_i32 = arith.constant 0 : i32
    %c0_i32_0 = arith.constant 0 : i32
    %c0_i32_1 = arith.constant 0 : i32
    return %c0_i32, %c0_i32_0 : i32, i32
  }
  func.func @transform_9(%arg0: i32) -> (i32, i32, i32) {
    %c0_i32 = arith.constant 0 : i32
    %c0_i32_0 = arith.constant 0 : i32
    %c0_i32_1 = arith.constant 0 : i32
    return %arg0, %c0_i32, %c0_i32_0 : i32, i32, i32
  }
  func.func @transform_10(%arg0: i32) -> (i32, i32, i32) {
    %c0_i32 = arith.constant 0 : i32
    %c0_i32_0 = arith.constant 0 : i32
    %c0_i32_1 = arith.constant 0 : i32
    return %arg0, %c0_i32, %c0_i32_0 : i32, i32, i32
  }
}

</mosaic_0001>

<llo_original>
// kernel: tpu_custom_call.1
$region0: #{tpu_custom_call.1}
  #allocation0 [shape = 'u32[]', space=smem, size = 0x4, offset = 0x4, fixed_abs, tag = 'smem constant byte address 0x4 - core index']
  #allocation1 [shape = 'u32[144,128]{1,0:T(1,128)}', space=vmem, size = 0x12000, scoped, tag = 'internal scratch']
  %s0 = inlined_call_operand.vmem [shape: f32[2,8,32], index: 0, kind: input, shape index: {}]
  %s1 = inlined_call_operand.vmem [shape: bf16[32,256], index: 1, kind: input, shape index: {}]
  %s2 = inlined_call_operand.vmem [shape: f32[1,256], index: 2, kind: input, shape index: {}]
  %s3 = inlined_call_operand.vmem [shape: bf16[128,32], index: 3, kind: input, shape index: {}]
  %s4 = inlined_call_operand.vmem [shape: f32[1,32], index: 4, kind: input, shape index: {}]
  %s5 = inlined_call_operand.vmem [shape: bf16[128,32], index: 5, kind: input, shape index: {}]
  %s6 = inlined_call_operand.vmem [shape: f32[1,32], index: 6, kind: input, shape index: {}]
  %s7 = inlined_call_operand.vmem [shape: bf16[32,128], index: 7, kind: input, shape index: {}]
  %s8 = inlined_call_operand.vmem [shape: bf16[32,128], index: 8, kind: input, shape index: {}]
  %s9 = inlined_call_operand.hbm [shape: bf16[2,8,128], index: 9, kind: output, shape index: {0}]
  %s10 = inlined_call_operand.hbm [shape: bf16[2,8,128], index: 10, kind: output, shape index: {1}]
  %11 = xla_tuple %s9, %s10
  %s12 = sld [smem:[#allocation0]]
  $region77: #{tpu_custom_call.1} parent=0
    _
  %s14 = ssub.s32 1, %s12
  %s15 = scalar_select 0, %s14, %s12
  $region1: #{tpu_custom_call.1} parent=0
    #allocation2 [shape = 'u8[4096]{0}', space=vmem, size = 0x1000, scoped, tag = 'output window, operand 0']
    #allocation3 [shape = 's32[2]{0}', space=sflag, size = 0x8, scoped, tag = 'scoped memory for tpu_custom_call.1']
    #allocation4 [shape = 'u8[4096]{0}', space=vmem, size = 0x1000, scoped, tag = 'output window, operand 1']
    #allocation5 [shape = 's32[2]{0}', space=sflag, size = 0x8, scoped, tag = 'scoped memory for tpu_custom_call.1']
    %16 = vsyncpa [#allocation3], 0
    %s17 = scalar_lea.sflag [#allocation3], 1
    %18 = vsyncpa %s17, 0
    %19 = vsyncpa [#allocation5], 0
    %s20 = scalar_lea.sflag [#allocation5], 1
    %21 = vsyncpa %s20, 0
    loop: start=0, step=1, limit=4
    $region2: #{tpu_custom_call.1} parent=1 // loop_pre_header
      _
    $region3: #{tpu_custom_call.1} parent=1 // loop_header
      %s23 = sphi 0, %s27
      %p24 = scmp.ge.s32.totalorder %s23, 4
      %s33 = sphi 0, %s35
      %s36 = sphi 0, %s33
      %s37 = sphi 0, %s36
      %s53 = sphi 0, %s37
      %s57 = sphi 0, %s57
      %s59 = sphi 0, %s57
      %s60 = sphi 0, %s59
      %s74 = sphi 0, %s60
      %s78 = sphi 0, %s78
      %s80 = sphi 0, %s78
      %s81 = sphi 0, %s80
      %s95 = sphi 0, %s81
      %s99 = sphi 0, %s99
      %s101 = sphi 0, %s99
      %s102 = sphi 0, %s101
      %s116 = sphi 0, %s102
      %s120 = sphi 0, %s120
      %s122 = sphi 0, %s120
      %s123 = sphi 0, %s122
      %s137 = sphi 0, %s123
      %s141 = sphi 0, %s141
      %s143 = sphi 0, %s141
      %s144 = sphi 0, %s143
      %s158 = sphi 0, %s144
      %s162 = sphi 0, %s162
      %s164 = sphi 0, %s162
      %s165 = sphi 0, %s164
      %s179 = sphi 0, %s165
      %s183 = sphi 0, %s183
      %s185 = sphi 0, %s183
      %s186 = sphi 0, %s185
      %s200 = sphi 0, %s186
      %s204 = sphi 0, %s204
      %s206 = sphi 0, %s204
      %s207 = sphi 0, %s206
      %s221 = sphi 0, %s207
      %s227 = sphi 0, %s229
      %s230 = sphi 0, %s227
      %s231 = sphi 0, %s230
      %s247 = sphi 0, %s231
      %s253 = sphi 0, %s255
      %s256 = sphi 0, %s253
      %s257 = sphi 0, %s256
      %s273 = sphi 0, %s257
    $region4: #{tpu_custom_call.1} parent=1 // loop_header_branch
      %26 = sbr.rel (%p24) target = $region8
    $region5: #{tpu_custom_call.1} parent=1 // loop_body
      %s28 = ssub.s32 %s23, 1
      %s29 = ssub.s32 %s23, 2
      %s30 = sadd.s32 %s23, 1
      %s31 = ssub.s32 %s23, %s30
      %p32 = scmp.eq.s32.totalorder %s31, 0
      %s34 = sadd.s32 %s33, 1
      %s35 = scalar_select %p32, %s33, %s34
      %p38 = pneg %p32
      %p39 = scmp.eq.s32.totalorder %s23, 1
      %p40 = por %p38, %p39
      %p41 = scmp.ne.s32.totalorder %s33, %s36
      %p42 = scmp.eq.s32.totalorder %s23, 0
      %p43 = por %p41, %p42
      %p44 = scmp.ne.s32.totalorder %s33, %s36
      %p45 = scmp.eq.s32.totalorder %s28, 1
      %p46 = por %p44, %p45
      %p47 = scmp.ne.s32.totalorder %s36, %s37
      %p48 = scmp.eq.s32.totalorder %s28, 0
      %p49 = por %p47, %p48
      %p50 = scmp.ne.s32.totalorder %s36, %s37
      %p51 = scmp.eq.s32.totalorder %s29, 1
      %p52 = por %p50, %p51
      %p54 = scmp.ne.s32.totalorder %s37, %s53
      %p55 = scmp.eq.s32.totalorder %s29, 0
      %p56 = por %p54, %p55
      %s58 = sadd.s32 %s57, 1
      %p61 = scmp.eq.s32.totalorder %s23, 1
      %p62 = scmp.ne.s32.totalorder %s57, %s59
      %p63 = scmp.eq.s32.totalorder %s23, 0
      %p64 = por %p62, %p63
      %p65 = scmp.ne.s32.totalorder %s57, %s59
      %p66 = scmp.eq.s32.totalorder %s28, 1
      %p67 = por %p65, %p66
      %p68 = scmp.ne.s32.totalorder %s59, %s60
      %p69 = scmp.eq.s32.totalorder %s28, 0
      %p70 = por %p68, %p69
      %p71 = scmp.ne.s32.totalorder %s59, %s60
      %p72 = scmp.eq.s32.totalorder %s29, 1
      %p73 = por %p71, %p72
      %p75 = scmp.ne.s32.totalorder %s60, %s74
      %p76 = scmp.eq.s32.totalorder %s29, 0
      %p77 = por %p75, %p76
      %s79 = sadd.s32 %s78, 1
      %p82 = scmp.eq.s32.totalorder %s23, 1
      %p83 = scmp.ne.s32.totalorder %s78, %s80
      %p84 = scmp.eq.s32.totalorder %s23, 0
      %p85 = por %p83, %p84
      %p86 = scmp.ne.s32.totalorder %s78, %s80
      %p87 = scmp.eq.s32.totalorder %s28, 1
      %p88 = por %p86, %p87
      %p89 = scmp.ne.s32.totalorder %s80, %s81
      %p90 = scmp.eq.s32.totalorder %s28, 0
      %p91 = por %p89, %p90
      %p92 = scmp.ne.s32.totalorder %s80, %s81
      %p93 = scmp.eq.s32.totalorder %s29, 1
      %p94 = por %p92, %p93
      %p96 = scmp.ne.s32.totalorder %s81, %s95
      %p97 = scmp.eq.s32.totalorder %s29, 0
      %p98 = por %p96, %p97
      %s100 = sadd.s32 %s99, 1
      %p103 = scmp.eq.s32.totalorder %s23, 1
      %p104 = scmp.ne.s32.totalorder %s99, %s101
      %p105 = scmp.eq.s32.totalorder %s23, 0
      %p106 = por %p104, %p105
      %p107 = scmp.ne.s32.totalorder %s99, %s101
      %p108 = scmp.eq.s32.totalorder %s28, 1
      %p109 = por %p107, %p108
      %p110 = scmp.ne.s32.totalorder %s101, %s102
      %p111 = scmp.eq.s32.totalorder %s28, 0
      %p112 = por %p110, %p111
      %p113 = scmp.ne.s32.totalorder %s101, %s102
      %p114 = scmp.eq.s32.totalorder %s29, 1
      %p115 = por %p113, %p114
      %p117 = scmp.ne.s32.totalorder %s102, %s116
      %p118 = scmp.eq.s32.totalorder %s29, 0
      %p119 = por %p117, %p118
      %s121 = sadd.s32 %s120, 1
      %p124 = scmp.eq.s32.totalorder %s23, 1
      %p125 = scmp.ne.s32.totalorder %s120, %s122
      %p126 = scmp.eq.s32.totalorder %s23, 0
      %p127 = por %p125, %p126
      %p128 = scmp.ne.s32.totalorder %s120, %s122
      %p129 = scmp.eq.s32.totalorder %s28, 1
      %p130 = por %p128, %p129
      %p131 = scmp.ne.s32.totalorder %s122, %s123
      %p132 = scmp.eq.s32.totalorder %s28, 0
      %p133 = por %p131, %p132
      %p134 = scmp.ne.s32.totalorder %s122, %s123
      %p135 = scmp.eq.s32.totalorder %s29, 1
      %p136 = por %p134, %p135
      %p138 = scmp.ne.s32.totalorder %s123, %s137
      %p139 = scmp.eq.s32.totalorder %s29, 0
      %p140 = por %p138, %p139
      %s142 = sadd.s32 %s141, 1
      %p145 = scmp.eq.s32.totalorder %s23, 1
      %p146 = scmp.ne.s32.totalorder %s141, %s143
      %p147 = scmp.eq.s32.totalorder %s23, 0
      %p148 = por %p146, %p147
      %p149 = scmp.ne.s32.totalorder %s141, %s143
      %p150 = scmp.eq.s32.totalorder %s28, 1
      %p151 = por %p149, %p150
      %p152 = scmp.ne.s32.totalorder %s143, %s144
      %p153 = scmp.eq.s32.totalorder %s28, 0
      %p154 = por %p152, %p153
      %p155 = scmp.ne.s32.totalorder %s143, %s144
      %p156 = scmp.eq.s32.totalorder %s29, 1
      %p157 = por %p155, %p156
      %p159 = scmp.ne.s32.totalorder %s144, %s158
      %p160 = scmp.eq.s32.totalorder %s29, 0
      %p161 = por %p159, %p160
      %s163 = sadd.s32 %s162, 1
      %p166 = scmp.eq.s32.totalorder %s23, 1
      %p167 = scmp.ne.s32.totalorder %s162, %s164
      %p168 = scmp.eq.s32.totalorder %s23, 0
      %p169 = por %p167, %p168
      %p170 = scmp.ne.s32.totalorder %s162, %s164
      %p171 = scmp.eq.s32.totalorder %s28, 1
      %p172 = por %p170, %p171
      %p173 = scmp.ne.s32.totalorder %s164, %s165
      %p174 = scmp.eq.s32.totalorder %s28, 0
      %p175 = por %p173, %p174
      %p176 = scmp.ne.s32.totalorder %s164, %s165
      %p177 = scmp.eq.s32.totalorder %s29, 1
      %p178 = por %p176, %p177
      %p180 = scmp.ne.s32.totalorder %s165, %s179
      %p181 = scmp.eq.s32.totalorder %s29, 0
      %p182 = por %p180, %p181
      %s184 = sadd.s32 %s183, 1
      %p187 = scmp.eq.s32.totalorder %s23, 1
      %p188 = scmp.ne.s32.totalorder %s183, %s185
      %p189 = scmp.eq.s32.totalorder %s23, 0
      %p190 = por %p188, %p189
      %p191 = scmp.ne.s32.totalorder %s183, %s185
      %p192 = scmp.eq.s32.totalorder %s28, 1
      %p193 = por %p191, %p192
      %p194 = scmp.ne.s32.totalorder %s185, %s186
      %p195 = scmp.eq.s32.totalorder %s28, 0
      %p196 = por %p194, %p195
      %p197 = scmp.ne.s32.totalorder %s185, %s186
      %p198 = scmp.eq.s32.totalorder %s29, 1
      %p199 = por %p197, %p198
      %p201 = scmp.ne.s32.totalorder %s186, %s200
      %p202 = scmp.eq.s32.totalorder %s29, 0
      %p203 = por %p201, %p202
      %s205 = sadd.s32 %s204, 1
      %p208 = scmp.eq.s32.totalorder %s23, 1
      %p209 = scmp.ne.s32.totalorder %s204, %s206
      %p210 = scmp.eq.s32.totalorder %s23, 0
      %p211 = por %p209, %p210
      %p212 = scmp.ne.s32.totalorder %s204, %s206
      %p213 = scmp.eq.s32.totalorder %s28, 1
      %p214 = por %p212, %p213
      %p215 = scmp.ne.s32.totalorder %s206, %s207
      %p216 = scmp.eq.s32.totalorder %s28, 0
      %p217 = por %p215, %p216
      %p218 = scmp.ne.s32.totalorder %s206, %s207
      %p219 = scmp.eq.s32.totalorder %s29, 1
      %p220 = por %p218, %p219
      %p222 = scmp.ne.s32.totalorder %s207, %s221
      %p223 = scmp.eq.s32.totalorder %s29, 0
      %p224 = por %p222, %p223
      %s225 = ssub.s32 %s23, %s30
      %p226 = scmp.eq.s32.totalorder %s225, 0
      %s228 = sadd.s32 %s227, 1
      %s229 = scalar_select %p226, %s227, %s228
      %p232 = pneg %p226
      %p233 = scmp.eq.s32.totalorder %s23, 1
      %p234 = por %p232, %p233
      %p235 = scmp.ne.s32.totalorder %s227, %s230
      %p236 = scmp.eq.s32.totalorder %s23, 0
      %p237 = por %p235, %p236
      %p238 = scmp.ne.s32.totalorder %s227, %s230
      %p239 = scmp.eq.s32.totalorder %s28, 1
      %p240 = por %p238, %p239
      %p241 = scmp.ne.s32.totalorder %s230, %s231
      %p242 = scmp.eq.s32.totalorder %s28, 0
      %p243 = por %p241, %p242
      %p244 = scmp.ne.s32.totalorder %s230, %s231
      %p245 = scmp.eq.s32.totalorder %s29, 1
      %p246 = por %p244, %p245
      %p248 = scmp.ne.s32.totalorder %s231, %s247
      %p249 = scmp.eq.s32.totalorder %s29, 0
      %p250 = por %p248, %p249
      %s251 = ssub.s32 %s23, %s30
      %p252 = scmp.eq.s32.totalorder %s251, 0
      %s254 = sadd.s32 %s253, 1
      %s255 = scalar_select %p252, %s253, %s254
      %p258 = pneg %p252
      %p259 = scmp.eq.s32.totalorder %s23, 1
      %p260 = por %p258, %p259
      %p261 = scmp.ne.s32.totalorder %s253, %s256
      %p262 = scmp.eq.s32.totalorder %s23, 0
      %p263 = por %p261, %p262
      %p264 = scmp.ne.s32.totalorder %s253, %s256
      %p265 = scmp.eq.s32.totalorder %s28, 1
      %p266 = por %p264, %p265
      %p267 = scmp.ne.s32.totalorder %s256, %s257
      %p268 = scmp.eq.s32.totalorder %s28, 0
      %p269 = por %p267, %p268
      %p270 = scmp.ne.s32.totalorder %s256, %s257
      %p271 = scmp.eq.s32.totalorder %s29, 1
      %p272 = por %p270, %p271
      %p274 = scmp.ne.s32.totalorder %s257, %s273
      %p275 = scmp.eq.s32.totalorder %s29, 0
      %p276 = por %p274, %p275
      %p277 = scmp.le.s32.totalorder 1, %s23
      %p278 = scmp.lt.s32.totalorder %s23, 3
      %p279 = pnand %p277, %p278
      %p280 = pneg %p279
      // Predicated region
      $region9: #{tpu_custom_call.1} parent=5 // pred_check
        _
      $region10: #{tpu_custom_call.1} parent=5 // pred_check_branch
        %282 = sbr.rel (%p279) target = $region12
      $region11: #{tpu_custom_call.1} parent=5 // pred_region
        %s283 = ssub.s32 %s23, 1
        // Predicated region
        $region13: #{tpu_custom_call.1} parent=11 // pred_check
          %p284 = pneg %p70
        $region14: #{tpu_custom_call.1} parent=11 // pred_check_branch
          %286 = sbr.rel (%p284) target = $region16
        $region15: #{tpu_custom_call.1} parent=11 // pred_region
          _
        $region16: #{tpu_custom_call.1} parent=11 // pred_fallthru
          _
        // Predicated region
        $region17: #{tpu_custom_call.1} parent=11 // pred_check
          %p287 = pneg %p91
        $region18: #{tpu_custom_call.1} parent=11 // pred_check_branch
          %289 = sbr.rel (%p287) target = $region20
        $region19: #{tpu_custom_call.1} parent=11 // pred_region
          _
        $region20: #{tpu_custom_call.1} parent=11 // pred_fallthru
          _
        // Predicated region
        $region21: #{tpu_custom_call.1} parent=11 // pred_check
          %p290 = pneg %p112
        $region22: #{tpu_custom_call.1} parent=11 // pred_check_branch
          %292 = sbr.rel (%p290) target = $region24
        $region23: #{tpu_custom_call.1} parent=11 // pred_region
          _
        $region24: #{tpu_custom_call.1} parent=11 // pred_fallthru
          _
        // Predicated region
        $region25: #{tpu_custom_call.1} parent=11 // pred_check
          %p293 = pneg %p133
        $region26: #{tpu_custom_call.1} parent=11 // pred_check_branch
          %295 = sbr.rel (%p293) target = $region28
        $region27: #{tpu_custom_call.1} parent=11 // pred_region
          _
        $region28: #{tpu_custom_call.1} parent=11 // pred_fallthru
          _
        // Predicated region
        $region29: #{tpu_custom_call.1} parent=11 // pred_check
          %p296 = pneg %p154
        $region30: #{tpu_custom_call.1} parent=11 // pred_check_branch
          %298 = sbr.rel (%p296) target = $region32
        $region31: #{tpu_custom_call.1} parent=11 // pred_region
          _
        $region32: #{tpu_custom_call.1} parent=11 // pred_fallthru
          _
        // Predicated region
        $region33: #{tpu_custom_call.1} parent=11 // pred_check
          %p299 = pneg %p175
        $region34: #{tpu_custom_call.1} parent=11 // pred_check_branch
          %301 = sbr.rel (%p299) target = $region36
        $region35: #{tpu_custom_call.1} parent=11 // pred_region
          _
        $region36: #{tpu_custom_call.1} parent=11 // pred_fallthru
          _
        // Predicated region
        $region37: #{tpu_custom_call.1} parent=11 // pred_check
          %p302 = pneg %p196
        $region38: #{tpu_custom_call.1} parent=11 // pred_check_branch
          %304 = sbr.rel (%p302) target = $region40
        $region39: #{tpu_custom_call.1} parent=11 // pred_region
          _
        $region40: #{tpu_custom_call.1} parent=11 // pred_fallthru
          _
        // Predicated region
        $region41: #{tpu_custom_call.1} parent=11 // pred_check
          %p305 = pneg %p217
        $region42: #{tpu_custom_call.1} parent=11 // pred_check_branch
          %307 = sbr.rel (%p305) target = $region44
        $region43: #{tpu_custom_call.1} parent=11 // pred_region
          _
        $region44: #{tpu_custom_call.1} parent=11 // pred_fallthru
          _
      $region12: #{tpu_custom_call.1} parent=5 // pred_fallthru
        _
      %p308 = scmp.lt.s32.totalorder %s23, 2
      // Predicated region
      $region45: #{tpu_custom_call.1} parent=5 // pred_check
        %p309 = pneg %p308
      $region46: #{tpu_custom_call.1} parent=5 // pred_check_branch
        %311 = sbr.rel (%p309) target = $region48
      $region47: #{tpu_custom_call.1} parent=5 // pred_region
        // Predicated region
        $region49: #{tpu_custom_call.1} parent=47 // pred_check
          %p312 = pneg %p43
        $region50: #{tpu_custom_call.1} parent=47 // pred_check_branch
          %314 = sbr.rel (%p312) target = $region52
        $region51: #{tpu_custom_call.1} parent=47 // pred_region
          %p315 = scmp.lt.s32.totalorder %s23, 1
          %s316 = scalar_select %p315, %s23, 1
          %s317 = smul.addr %s316, 8
          %s318 = scalar_lea.vmem %s0, %s317
        $region52: #{tpu_custom_call.1} parent=47 // pred_fallthru
          _
      $region48: #{tpu_custom_call.1} parent=5 // pred_fallthru
        _
      %p319 = scmp.le.s32.totalorder 1, %s23
      %p320 = scmp.lt.s32.totalorder %s23, 3
      %p321 = pnand %p319, %p320
      %p322 = pneg %p321
      // Predicated region
      $region53: #{tpu_custom_call.1} parent=5 // pred_check
        _
      $region54: #{tpu_custom_call.1} parent=5 // pred_check_branch
        %324 = sbr.rel (%p321) target = $region56
      $region55: #{tpu_custom_call.1} parent=5 // pred_region
        %s325 = ssub.s32 %s23, 1
        %p326 = scmp.lt.s32.totalorder %s28, 1
        %s327 = scalar_select %p326, %s28, 1
        %s328 = smul.addr %s327, 8
        %s329 = scalar_lea.vmem %s0, %s328
        %p330 = pneg %p49
        %p331 = pneg %p46
        %p332 = pneg %p70
        %p333 = pneg %p67
        %p334 = pneg %p91
        %p335 = pneg %p88
        %p336 = pneg %p112
        %p337 = pneg %p109
        %p338 = pneg %p133
        %p339 = pneg %p130
        %p340 = pneg %p154
        %p341 = pneg %p151
        %p342 = pneg %p175
        %p343 = pneg %p172
        %p344 = pneg %p196
        %p345 = pneg %p193
        %p346 = pneg %p217
        %p347 = pneg %p214
        %p348 = pneg %p243
        %p349 = pneg %p240
        %s350 = sand.u32 %s230, 1
        %s351 = scalar_lea.sflag [#allocation3], %s350
        %s352 = sand.u32 %s230, 1
        %s353 = smul.addr %s352, 4
        %s354 = scalar_lea.vmem [#allocation2], %s353
        %p355 = pneg %p269
        %p356 = pneg %p266
        %s357 = sand.u32 %s256, 1
        %s358 = scalar_lea.sflag [#allocation5], %s357
        %s359 = sand.u32 %s256, 1
        %s360 = smul.addr %s359, 4
        %s361 = scalar_lea.vmem [#allocation4], %s360
        %p362 = scmp.lt.s32.totalorder %s28, 1
        %s363 = scalar_select %p362, %s28, 1
        %s364 = smul.addr %s363, 8
        %s365 = scalar_lea.vmem %s0, %s364
        %v367 = vld [vmem:[%s365] sm:$0xff]
        %v368 = vpack.c.bf16 %v367, %v367
        %v369 = vld [vmem:[%s1] sm:$0xff]
        %v370 = vld [vmem:[%s1 + $0x8] sm:$0xff]
        %v371 = vld [vmem:[%s1 + $0x10] sm:$0xff]
        %v372 = vld [vmem:[%s1 + $0x18] sm:$0xff]
        %v373 = vld [vmem:[%s2] sm:$0x3]
        %v375 = vlaneseq
        %v376 = vshrl.u32 %v375, 7
        %v377 = vsub.s32 0, %v376
        %v378 = vrot.slane %v373, %v377
        %v379 = vlaneseq
        %v380 = vshrl.u32 %v379, 7
        %v381 = vsub.s32 1, %v380
        %v382 = vrot.slane %v373, %v381
        %v389 = vunpack.c.l.b16 %v369
        %v390 = vunpack.c.h.b16 %v369
        %v391 = vunpack.c.l.b16 %v370
        %v392 = vunpack.c.h.b16 %v370
        %v393 = vunpack.c.l.b16 %v371
        %v394 = vunpack.c.h.b16 %v371
        %v395 = vunpack.c.l.b16 %v372
        %v396 = vunpack.c.h.b16 %v372
        %v397 = vpack.c.b16 %v391, %v389
        %v398 = vpack.c.b16 %v392, %v390
        %v399 = vpack.c.b16 %v395, %v393
        %v400 = vpack.c.b16 %v396, %v394
        %vm405 = vcmask 261120
        %v407 = vsel %vm405, %v368, 0
        %409 = vmatprep.subr.bf16.mxu0 %v398
        %410 = vmatpush1.bf16.msra.mxu0 %v397
        %411 = vmatprep.subr.bf16.mxu0 %v400
        %412 = vmatpush1.bf16.msra.mxu0 %v399
        %413 = vmatprep.subr.bf16.mxu0 0
        %414 = vmatpush1.bf16.msra.mxu0 0
        %415 = vmatprep.subr.bf16.mxu0 0
        %416 = vmatpush1.bf16.msra.mxu0 0
        %417 = vmatprep.subr.bf16.mxu0 0
        %418 = vmatpush1.bf16.msra.mxu0 0
        %419 = vmatprep.subr.bf16.mxu0 0
        %420 = vmatpush1.bf16.msra.mxu0 0
        %421 = vmatprep.subr.bf16.mxu0 0
        %422 = vmatpush1.bf16.msra.mxu0 0
        %423 = vmatprep.subr.bf16.mxu0 0
        %424 = vmatpush1.bf16.msra.mxu0 0
        %425 = vmatprep.subr.bf16.mxu0 0
        %426 = vmatpush1.bf16.msra.mxu0 0
        %427 = vmatprep.subr.bf16.mxu0 0
        %428 = vmatpush1.bf16.msra.mxu0 0
        %429 = vmatprep.subr.bf16.mxu0 0
        %430 = vmatpush1.bf16.msra.mxu0 0
        %431 = vmatprep.subr.bf16.mxu0 0
        %432 = vmatpush1.bf16.msra.mxu0 0
        %433 = vmatprep.subr.bf16.mxu0 0
        %434 = vmatpush1.bf16.msra.mxu0 0
        %435 = vmatprep.subr.bf16.mxu0 0
        %436 = vmatpush1.bf16.msra.mxu0 0
        %437 = vmatprep.subr.bf16.mxu0 0
        %438 = vmatpush1.bf16.msra.mxu0 0
        %439 = vmatprep.subr.bf16.mxu0 0
        %440 = vmatpush1.bf16.msra.mxu0 0
        %441 = vmatprep.mubr.bf16.mxu0 0
        %442 = vmatmul.mubr.bf16.gmra.mrb[0].mxu0 %v407
        %v443 = vpop.f32.mrb[0].mxu0
        %v444 = vadd.f32 %v378, %v443
        %v445 = vpop.f32.mrb[0].mxu0
        %v446 = vadd.f32 %v382, %v445
        %v447 = vpop.f32.mrb[0].mxu0
        %v448 = vpop.f32.mrb[0].mxu0
        %449 = vdwg.mxu0
        %v450 = vmax.f32 %v444, 0.0
        %v451 = vmax.f32 %v446, 0.0
        %v452 = vpack.c.bf16 %v450, %v450
        %v453 = vpack.c.bf16 %v451, %v451
        %v454 = vld [vmem:[%s3] sm:$0xf]
        %v455 = vld [vmem:[%s3 + $0x4] sm:$0xf]
        %v456 = vld [vmem:[%s3 + $0x8] sm:$0xf]
        %v457 = vld [vmem:[%s3 + $0xc] sm:$0xf]
        %v458 = vld [vmem:[%s3 + $0x10] sm:$0xf]
        %v459 = vld [vmem:[%s3 + $0x14] sm:$0xf]
        %v460 = vld [vmem:[%s3 + $0x18] sm:$0xf]
        %v461 = vld [vmem:[%s3 + $0x1c] sm:$0xf]
        %v462 = vld [vmem:[%s3 + $0x20] sm:$0xf]
        %v463 = vld [vmem:[%s3 + $0x24] sm:$0xf]
        %v464 = vld [vmem:[%s3 + $0x28] sm:$0xf]
        %v465 = vld [vmem:[%s3 + $0x2c] sm:$0xf]
        %v466 = vld [vmem:[%s3 + $0x30] sm:$0xf]
        %v467 = vld [vmem:[%s3 + $0x34] sm:$0xf]
        %v468 = vld [vmem:[%s3 + $0x38] sm:$0xf]
        %v469 = vld [vmem:[%s3 + $0x3c] sm:$0xf]
        %v470 = vld [vmem:[%s4] sm:$0x1]
        %v472 = vlaneseq
        %v473 = vshrl.u32 %v472, 7
        %v474 = vsub.s32 0, %v473
        %v475 = vrot.slane %v470, %v474
        %v493 = vunpack.c.l.b16 %v454
        %v494 = vunpack.c.l.b16 %v455
        %v495 = vunpack.c.l.b16 %v456
        %v496 = vunpack.c.l.b16 %v457
        %v497 = vunpack.c.l.b16 %v458
        %v498 = vunpack.c.l.b16 %v459
        %v499 = vunpack.c.l.b16 %v460
        %v500 = vunpack.c.l.b16 %v461
        %v501 = vunpack.c.l.b16 %v462
        %v502 = vunpack.c.l.b16 %v463
        %v503 = vunpack.c.l.b16 %v464
        %v504 = vunpack.c.l.b16 %v465
        %v505 = vunpack.c.l.b16 %v466
        %v506 = vunpack.c.l.b16 %v467
        %v507 = vunpack.c.l.b16 %v468
        %v508 = vunpack.c.l.b16 %v469
        %v509 = vpack.c.b16 %v494, %v493
        %v510 = vpack.c.b16 %v496, %v495
        %v511 = vpack.c.b16 %v498, %v497
        %v512 = vpack.c.b16 %v500, %v499
        %v513 = vpack.c.b16 %v502, %v501
        %v514 = vpack.c.b16 %v504, %v503
        %v515 = vpack.c.b16 %v506, %v505
        %v516 = vpack.c.b16 %v508, %v507
        %525 = vmatprep.subr.bf16.mxu0 0
        %526 = vmatpush1.bf16.msra.mxu0 %v509
        %527 = vmatprep.subr.bf16.mxu0 0
        %528 = vmatpush1.bf16.msra.mxu0 %v510
        %529 = vmatprep.subr.bf16.mxu0 0
        %530 = vmatpush1.bf16.msra.mxu0 %v511
        %531 = vmatprep.subr.bf16.mxu0 0
        %532 = vmatpush1.bf16.msra.mxu0 %v512
        %533 = vmatprep.subr.bf16.mxu0 0
        %534 = vmatpush1.bf16.msra.mxu0 %v513
        %535 = vmatprep.subr.bf16.mxu0 0
        %536 = vmatpush1.bf16.msra.mxu0 %v514
        %537 = vmatprep.subr.bf16.mxu0 0
        %538 = vmatpush1.bf16.msra.mxu0 %v515
        %539 = vmatprep.subr.bf16.mxu0 0
        %540 = vmatpush1.bf16.msra.mxu0 %v516
        %541 = vmatprep.subr.bf16.mxu0 0
        %542 = vmatpush1.bf16.msra.mxu0 0
        %543 = vmatprep.subr.bf16.mxu0 0
        %544 = vmatpush1.bf16.msra.mxu0 0
        %545 = vmatprep.subr.bf16.mxu0 0
        %546 = vmatpush1.bf16.msra.mxu0 0
        %547 = vmatprep.subr.bf16.mxu0 0
        %548 = vmatpush1.bf16.msra.mxu0 0
        %549 = vmatprep.subr.bf16.mxu0 0
        %550 = vmatpush1.bf16.msra.mxu0 0
        %551 = vmatprep.subr.bf16.mxu0 0
        %552 = vmatpush1.bf16.msra.mxu0 0
        %553 = vmatprep.subr.bf16.mxu0 0
        %554 = vmatpush1.bf16.msra.mxu0 0
        %555 = vmatprep.subr.bf16.mxu0 0
        %556 = vmatpush1.bf16.msra.mxu0 0
        %557 = vmatprep.mubr.bf16.mxu0 0
        %558 = vmatmul.mubr.bf16.gmra.mrb[0].mxu0 %v452
        %v559 = vpop.f32.mrb[0].mxu0
        %v560 = vadd.f32 %v475, %v559
        %v561 = vpop.f32.mrb[0].mxu0
        %v562 = vpop.f32.mrb[0].mxu0
        %v563 = vpop.f32.mrb[0].mxu0
        %564 = vdwg.mxu0
        %v565 = vld [vmem:[%s5] sm:$0xf]
        %v566 = vld [vmem:[%s5 + $0x4] sm:$0xf]
        %v567 = vld [vmem:[%s5 + $0x8] sm:$0xf]
        %v568 = vld [vmem:[%s5 + $0xc] sm:$0xf]
        %v569 = vld [vmem:[%s5 + $0x10] sm:$0xf]
        %v570 = vld [vmem:[%s5 + $0x14] sm:$0xf]
        %v571 = vld [vmem:[%s5 + $0x18] sm:$0xf]
        %v572 = vld [vmem:[%s5 + $0x1c] sm:$0xf]
        %v573 = vld [vmem:[%s5 + $0x20] sm:$0xf]
        %v574 = vld [vmem:[%s5 + $0x24] sm:$0xf]
        %v575 = vld [vmem:[%s5 + $0x28] sm:$0xf]
        %v576 = vld [vmem:[%s5 + $0x2c] sm:$0xf]
        %v577 = vld [vmem:[%s5 + $0x30] sm:$0xf]
        %v578 = vld [vmem:[%s5 + $0x34] sm:$0xf]
        %v579 = vld [vmem:[%s5 + $0x38] sm:$0xf]
        %v580 = vld [vmem:[%s5 + $0x3c] sm:$0xf]
        %v581 = vld [vmem:[%s6] sm:$0x1]
        %v583 = vlaneseq
        %v584 = vshrl.u32 %v583, 7
        %v585 = vsub.s32 0, %v584
        %v586 = vrot.slane %v581, %v585
        %v604 = vunpack.c.l.b16 %v565
        %v605 = vunpack.c.l.b16 %v566
        %v606 = vunpack.c.l.b16 %v567
        %v607 = vunpack.c.l.b16 %v568
        %v608 = vunpack.c.l.b16 %v569
        %v609 = vunpack.c.l.b16 %v570
        %v610 = vunpack.c.l.b16 %v571
        %v611 = vunpack.c.l.b16 %v572
        %v612 = vunpack.c.l.b16 %v573
        %v613 = vunpack.c.l.b16 %v574
        %v614 = vunpack.c.l.b16 %v575
        %v615 = vunpack.c.l.b16 %v576
        %v616 = vunpack.c.l.b16 %v577
        %v617 = vunpack.c.l.b16 %v578
        %v618 = vunpack.c.l.b16 %v579
        %v619 = vunpack.c.l.b16 %v580
        %v620 = vpack.c.b16 %v605, %v604
        %v621 = vpack.c.b16 %v607, %v606
        %v622 = vpack.c.b16 %v609, %v608
        %v623 = vpack.c.b16 %v611, %v610
        %v624 = vpack.c.b16 %v613, %v612
        %v625 = vpack.c.b16 %v615, %v614
        %v626 = vpack.c.b16 %v617, %v616
        %v627 = vpack.c.b16 %v619, %v618
        %636 = vmatprep.subr.bf16.mxu0 0
        %637 = vmatpush1.bf16.msra.mxu0 %v620
        %638 = vmatprep.subr.bf16.mxu0 0
        %639 = vmatpush1.bf16.msra.mxu0 %v621
        %640 = vmatprep.subr.bf16.mxu0 0
        %641 = vmatpush1.bf16.msra.mxu0 %v622
        %642 = vmatprep.subr.bf16.mxu0 0
        %643 = vmatpush1.bf16.msra.mxu0 %v623
        %644 = vmatprep.subr.bf16.mxu0 0
        %645 = vmatpush1.bf16.msra.mxu0 %v624
        %646 = vmatprep.subr.bf16.mxu0 0
        %647 = vmatpush1.bf16.msra.mxu0 %v625
        %648 = vmatprep.subr.bf16.mxu0 0
        %649 = vmatpush1.bf16.msra.mxu0 %v626
        %650 = vmatprep.subr.bf16.mxu0 0
        %651 = vmatpush1.bf16.msra.mxu0 %v627
        %652 = vmatprep.subr.bf16.mxu0 0
        %653 = vmatpush1.bf16.msra.mxu0 0
        %654 = vmatprep.subr.bf16.mxu0 0
        %655 = vmatpush1.bf16.msra.mxu0 0
        %656 = vmatprep.subr.bf16.mxu0 0
        %657 = vmatpush1.bf16.msra.mxu0 0
        %658 = vmatprep.subr.bf16.mxu0 0
        %659 = vmatpush1.bf16.msra.mxu0 0
        %660 = vmatprep.subr.bf16.mxu0 0
        %661 = vmatpush1.bf16.msra.mxu0 0
        %662 = vmatprep.subr.bf16.mxu0 0
        %663 = vmatpush1.bf16.msra.mxu0 0
        %664 = vmatprep.subr.bf16.mxu0 0
        %665 = vmatpush1.bf16.msra.mxu0 0
        %666 = vmatprep.subr.bf16.mxu0 0
        %667 = vmatpush1.bf16.msra.mxu0 0
        %668 = vmatprep.mubr.bf16.mxu0 0
        %669 = vmatmul.mubr.bf16.gmra.mrb[0].mxu0 %v453
        %v670 = vpop.f32.mrb[0].mxu0
        %v671 = vadd.f32 %v586, %v670
        %v672 = vpop.f32.mrb[0].mxu0
        %v673 = vpop.f32.mrb[0].mxu0
        %v674 = vpop.f32.mrb[0].mxu0
        %675 = vdwg.mxu0
        %v676 = vmax.f32 %v560, 0.0
        %v677 = vpack.c.bf16 %v676, %v676
        %v678 = vmax.f32 %v671, 0.0
        %v679 = vpack.c.bf16 %v678, %v678
        %v680 = vld [vmem:[%s7] sm:$0xf]
        %v681 = vld [vmem:[%s7 + $0x4] sm:$0xf]
        %v682 = vld [vmem:[%s7 + $0x8] sm:$0xf]
        %v683 = vld [vmem:[%s7 + $0xc] sm:$0xf]
        %v688 = vunpack.c.l.b16 %v680
        %v689 = vunpack.c.l.b16 %v681
        %v690 = vunpack.c.l.b16 %v682
        %v691 = vunpack.c.l.b16 %v683
        %v692 = vpack.c.b16 %v689, %v688
        %v693 = vpack.c.b16 %v691, %v690
        %v697 = vsel %vm405, %v677, 0
        %699 = vmatprep.subr.bf16.mxu0 0
        %700 = vmatpush1.bf16.msra.mxu0 %v692
        %701 = vmatprep.subr.bf16.mxu0 0
        %702 = vmatpush1.bf16.msra.mxu0 %v693
        %703 = vmatprep.subr.bf16.mxu0 0
        %704 = vmatpush1.bf16.msra.mxu0 0
        %705 = vmatprep.subr.bf16.mxu0 0
        %706 = vmatpush1.bf16.msra.mxu0 0
        %707 = vmatprep.subr.bf16.mxu0 0
        %708 = vmatpush1.bf16.msra.mxu0 0
        %709 = vmatprep.subr.bf16.mxu0 0
        %710 = vmatpush1.bf16.msra.mxu0 0
        %711 = vmatprep.subr.bf16.mxu0 0
        %712 = vmatpush1.bf16.msra.mxu0 0
        %713 = vmatprep.subr.bf16.mxu0 0
        %714 = vmatpush1.bf16.msra.mxu0 0
        %715 = vmatprep.subr.bf16.mxu0 0
        %716 = vmatpush1.bf16.msra.mxu0 0
        %717 = vmatprep.subr.bf16.mxu0 0
        %718 = vmatpush1.bf16.msra.mxu0 0
        %719 = vmatprep.subr.bf16.mxu0 0
        %720 = vmatpush1.bf16.msra.mxu0 0
        %721 = vmatprep.subr.bf16.mxu0 0
        %722 = vmatpush1.bf16.msra.mxu0 0
        %723 = vmatprep.subr.bf16.mxu0 0
        %724 = vmatpush1.bf16.msra.mxu0 0
        %725 = vmatprep.subr.bf16.mxu0 0
        %726 = vmatpush1.bf16.msra.mxu0 0
        %727 = vmatprep.subr.bf16.mxu0 0
        %728 = vmatpush1.bf16.msra.mxu0 0
        %729 = vmatprep.subr.bf16.mxu0 0
        %730 = vmatpush1.bf16.msra.mxu0 0
        %731 = vmatprep.mubr.bf16.mxu0 0
        %732 = vmatmul.mubr.bf16.gmra.mrb[0].mxu0 %v697
        %v733 = vpop.f32.mrb[0].mxu0
        %v734 = vadd.f32 0.0, %v733
        %v735 = vpop.f32.mrb[0].mxu0
        %v736 = vpop.f32.mrb[0].mxu0
        %v737 = vpop.f32.mrb[0].mxu0
        %738 = vdwg.mxu0
        %v739 = vpack.c.bf16 %v734, %v734
        %740 = vst [vmem:[%s354] sm:$0xf] %v739
        %v741 = vld [vmem:[%s8] sm:$0xf]
        %v742 = vld [vmem:[%s8 + $0x4] sm:$0xf]
        %v743 = vld [vmem:[%s8 + $0x8] sm:$0xf]
        %v744 = vld [vmem:[%s8 + $0xc] sm:$0xf]
        %v749 = vunpack.c.l.b16 %v741
        %v750 = vunpack.c.l.b16 %v742
        %v751 = vunpack.c.l.b16 %v743
        %v752 = vunpack.c.l.b16 %v744
        %v753 = vpack.c.b16 %v750, %v749
        %v754 = vpack.c.b16 %v752, %v751
        %v758 = vsel %vm405, %v679, 0
        %760 = vmatprep.subr.bf16.mxu0 0
        %761 = vmatpush1.bf16.msra.mxu0 %v753
        %762 = vmatprep.subr.bf16.mxu0 0
        %763 = vmatpush1.bf16.msra.mxu0 %v754
        %764 = vmatprep.subr.bf16.mxu0 0
        %765 = vmatpush1.bf16.msra.mxu0 0
        %766 = vmatprep.subr.bf16.mxu0 0
        %767 = vmatpush1.bf16.msra.mxu0 0
        %768 = vmatprep.subr.bf16.mxu0 0
        %769 = vmatpush1.bf16.msra.mxu0 0
        %770 = vmatprep.subr.bf16.mxu0 0
        %771 = vmatpush1.bf16.msra.mxu0 0
        %772 = vmatprep.subr.bf16.mxu0 0
        %773 = vmatpush1.bf16.msra.mxu0 0
        %774 = vmatprep.subr.bf16.mxu0 0
        %775 = vmatpush1.bf16.msra.mxu0 0
        %776 = vmatprep.subr.bf16.mxu0 0
        %777 = vmatpush1.bf16.msra.mxu0 0
        %778 = vmatprep.subr.bf16.mxu0 0
        %779 = vmatpush1.bf16.msra.mxu0 0
        %780 = vmatprep.subr.bf16.mxu0 0
        %781 = vmatpush1.bf16.msra.mxu0 0
        %782 = vmatprep.subr.bf16.mxu0 0
        %783 = vmatpush1.bf16.msra.mxu0 0
        %784 = vmatprep.subr.bf16.mxu0 0
        %785 = vmatpush1.bf16.msra.mxu0 0
        %786 = vmatprep.subr.bf16.mxu0 0
        %787 = vmatpush1.bf16.msra.mxu0 0
        %788 = vmatprep.subr.bf16.mxu0 0
        %789 = vmatpush1.bf16.msra.mxu0 0
        %790 = vmatprep.subr.bf16.mxu0 0
        %791 = vmatpush1.bf16.msra.mxu0 0
        %792 = vmatprep.mubr.bf16.mxu0 0
        %793 = vmatmul.mubr.bf16.gmra.mrb[0].mxu0 %v758
        %v794 = vpop.f32.mrb[0].mxu0
        %v795 = vadd.f32 0.0, %v794
        %v796 = vpop.f32.mrb[0].mxu0
        %v797 = vpop.f32.mrb[0].mxu0
        %v798 = vpop.f32.mrb[0].mxu0
        %799 = vdwg.mxu0
        %v800 = vpack.c.bf16 %v795, %v795
        %801 = vst [vmem:[%s361] sm:$0xf] %v800
        %s802 = sand.u32 %s230, 1
        %s803 = scalar_lea.sflag [#allocation3], %s802
        %s804 = sand.u32 %s230, 1
        %s805 = smul.addr %s804, 4
        %s806 = scalar_lea.vmem [#allocation2], %s805
        %s807 = sand.u32 %s256, 1
        %s808 = scalar_lea.sflag [#allocation5], %s807
        %s809 = sand.u32 %s256, 1
        %s810 = smul.addr %s809, 4
        %s811 = scalar_lea.vmem [#allocation4], %s810
        // Predicated region
        $region57: #{tpu_custom_call.1} parent=55 // pred_check
          %p812 = pneg %p240
        $region58: #{tpu_custom_call.1} parent=55 // pred_check_branch
          %814 = sbr.rel (%p812) target = $region60
        $region59: #{tpu_custom_call.1} parent=55 // pred_region
          %s816 = ssub.s32 64, 64
          %817 = vsyncadd %s803, %s816
          %s818 = smul.addr %s28, 64
          %s819 = scalar_lea.hbm %s9, %s818
          %s821 = sshll.u32 %s806, 4
          %s822 = int_to_ptr.vmem [resolvable:$true] %s821
          %824 = dma.vmem_to_hbm [thread:$0]  %s822, 64, %s819, %s803
        $region60: #{tpu_custom_call.1} parent=55 // pred_fallthru
          _
        // Predicated region
        $region61: #{tpu_custom_call.1} parent=55 // pred_check
          %p825 = pneg %p266
        $region62: #{tpu_custom_call.1} parent=55 // pred_check_branch
          %827 = sbr.rel (%p825) target = $region64
        $region63: #{tpu_custom_call.1} parent=55 // pred_region
          %s829 = ssub.s32 64, 64
          %830 = vsyncadd %s808, %s829
          %s831 = smul.addr %s28, 64
          %s832 = scalar_lea.hbm %s10, %s831
          %s834 = sshll.u32 %s811, 4
          %s835 = int_to_ptr.vmem [resolvable:$true] %s834
          %837 = dma.vmem_to_hbm [thread:$0]  %s835, 64, %s832, %s808
        $region64: #{tpu_custom_call.1} parent=55 // pred_fallthru
          _
      $region56: #{tpu_custom_call.1} parent=5 // pred_fallthru
        _
      %p838 = scmp.le.s32.totalorder 2, %s23
      // Predicated region
      $region65: #{tpu_custom_call.1} parent=5 // pred_check
        %p839 = pneg %p838
      $region66: #{tpu_custom_call.1} parent=5 // pred_check_branch
        %841 = sbr.rel (%p839) target = $region68
      $region67: #{tpu_custom_call.1} parent=5 // pred_region
        %s842 = ssub.s32 %s23, 2
        // Predicated region
        $region69: #{tpu_custom_call.1} parent=67 // pred_check
          %p843 = pneg %p246
        $region70: #{tpu_custom_call.1} parent=67 // pred_check_branch
          %845 = sbr.rel (%p843) target = $region72
        $region71: #{tpu_custom_call.1} parent=67 // pred_region
          %s846 = sand.u32 %s231, 1
          %s847 = scalar_lea.sflag [#allocation3], %s846
          %s848 = sand.u32 %s231, 1
          %s849 = smul.addr %s848, 4
          %s850 = scalar_lea.vmem [#allocation2], %s849
          %851 = dma.done %s847, 64
        $region72: #{tpu_custom_call.1} parent=67 // pred_fallthru
          _
        // Predicated region
        $region73: #{tpu_custom_call.1} parent=67 // pred_check
          %p852 = pneg %p272
        $region74: #{tpu_custom_call.1} parent=67 // pred_check_branch
          %854 = sbr.rel (%p852) target = $region76
        $region75: #{tpu_custom_call.1} parent=67 // pred_region
          %s855 = sand.u32 %s257, 1
          %s856 = scalar_lea.sflag [#allocation5], %s855
          %s857 = sand.u32 %s257, 1
          %s858 = smul.addr %s857, 4
          %s859 = scalar_lea.vmem [#allocation4], %s858
          %860 = dma.done %s856, 64
        $region76: #{tpu_custom_call.1} parent=67 // pred_fallthru
          _
      $region68: #{tpu_custom_call.1} parent=5 // pred_fallthru
        _
    $region6: #{tpu_custom_call.1} parent=1 // loop_footer
      %s27 = sadd.s32 1, %s23
    $region7: #{tpu_custom_call.1} parent=1 // loop_footer_branch
      %22 = sbr.rel target = $region3
    $region8: #{tpu_custom_call.1} parent=1 // loop_exit
      _
    %861 = vsyncpa [#allocation3], 1
    %s862 = scalar_lea.sflag [#allocation3], 1
    %863 = vsyncpa %s862, 1
    %864 = vsyncpa [#allocation5], 1
    %s865 = scalar_lea.sflag [#allocation5], 1
    %866 = vsyncpa %s865, 1

// kernel: tpu_custom_call.1
$region0: #{tpu_custom_call.1}
  #allocation0 [shape = 'u32[]', space=smem, size = 0x4, offset = 0x4, fixed_abs, tag = 'smem constant byte address 0x4 - core index']
  #allocation1 [shape = 'u32[144,128]{1,0:T(1,128)}', space=vmem, size = 0x12000, scoped, tag = 'internal scratch']
  %s0 = inlined_call_operand.vmem [shape: f32[2,8,32], index: 0, kind: input, shape index: {}]
  %s1 = inlined_call_operand.vmem [shape: bf16[32,256], index: 1, kind: input, shape index: {}]
  %s2 = inlined_call_operand.vmem [shape: f32[1,256], index: 2, kind: input, shape index: {}]
  %s3 = inlined_call_operand.vmem [shape: bf16[128,32], index: 3, kind: input, shape index: {}]
  %s4 = inlined_call_operand.vmem [shape: f32[1,32], index: 4, kind: input, shape index: {}]
  %s5 = inlined_call_operand.vmem [shape: bf16[128,32], index: 5, kind: input, shape index: {}]
  %s6 = inlined_call_operand.vmem [shape: f32[1,32], index: 6, kind: input, shape index: {}]
  %s7 = inlined_call_operand.vmem [shape: bf16[32,128], index: 7, kind: input, shape index: {}]
  %s8 = inlined_call_operand.vmem [shape: bf16[32,128], index: 8, kind: input, shape index: {}]
  %s9 = inlined_call_operand.hbm [shape: bf16[2,8,128], index: 9, kind: output, shape index: {0}]
  %s10 = inlined_call_operand.hbm [shape: bf16[2,8,128], index: 10, kind: output, shape index: {1}]
  %11 = xla_tuple %s9, %s10
  %s12 = sld [smem:[#allocation0]]
  $region77: #{tpu_custom_call.1} parent=0
    _
  %s14 = ssub.s32 1, %s12
  %s15 = scalar_select 0, %s14, %s12
  $region1: #{tpu_custom_call.1} parent=0
    #allocation2 [shape = 'u8[4096]{0}', space=vmem, size = 0x1000, scoped, tag = 'output window, operand 0']
    #allocation3 [shape = 's32[2]{0}', space=sflag, size = 0x8, scoped, tag = 'scoped memory for tpu_custom_call.1']
    #allocation4 [shape = 'u8[4096]{0}', space=vmem, size = 0x1000, scoped, tag = 'output window, operand 1']
    #allocation5 [shape = 's32[2]{0}', space=sflag, size = 0x8, scoped, tag = 'scoped memory for tpu_custom_call.1']
    %16 = vsyncpa [#allocation3], 0
    %s17 = scalar_lea.sflag [#allocation3], 1
    %18 = vsyncpa %s17, 0
    %19 = vsyncpa [#allocation5], 0
    %s20 = scalar_lea.sflag [#allocation5], 1
    %21 = vsyncpa %s20, 0
    loop: start=0, step=1, limit=4
    $region2: #{tpu_custom_call.1} parent=1 // loop_pre_header
      _
    $region3: #{tpu_custom_call.1} parent=1 // loop_header
      %s23 = sphi 0, %s27
      %p24 = scmp.ge.s32.totalorder %s23, 4
      %s33 = sphi 0, %s35
      %s36 = sphi 0, %s33
      %s37 = sphi 0, %s36
      %s53 = sphi 0, %s37
      %s57 = sphi 0, %s57
      %s59 = sphi 0, %s57
      %s60 = sphi 0, %s59
      %s74 = sphi 0, %s60
      %s78 = sphi 0, %s78
      %s80 = sphi 0, %s78
      %s81 = sphi 0, %s80
      %s95 = sphi 0, %s81
      %s99 = sphi 0, %s99
      %s101 = sphi 0, %s99
      %s102 = sphi 0, %s101
      %s116 = sphi 0, %s102
      %s120 = sphi 0, %s120
      %s122 = sphi 0, %s120
      %s123 = sphi 0, %s122
      %s137 = sphi 0, %s123
      %s141 = sphi 0, %s141
      %s143 = sphi 0, %s141
      %s144 = sphi 0, %s143
      %s158 = sphi 0, %s144
      %s162 = sphi 0, %s162
      %s164 = sphi 0, %s162
      %s165 = sphi 0, %s164
      %s179 = sphi 0, %s165
      %s183 = sphi 0, %s183
      %s185 = sphi 0, %s183
      %s186 = sphi 0, %s185
      %s200 = sphi 0, %s186
      %s204 = sphi 0, %s204
      %s206 = sphi 0, %s204
      %s207 = sphi 0, %s206
      %s221 = sphi 0, %s207
      %s227 = sphi 0, %s229
      %s230 = sphi 0, %s227
      %s231 = sphi 0, %s230
      %s247 = sphi 0, %s231
      %s253 = sphi 0, %s255
      %s256 = sphi 0, %s253
      %s257 = sphi 0, %s256
      %s273 = sphi 0, %s257
    $region4: #{tpu_custom_call.1} parent=1 // loop_header_branch
      %26 = sbr.rel (%p24) target = $region8
    $region5: #{tpu_custom_call.1} parent=1 // loop_body
      %s28 = ssub.s32 %s23, 1
      %s29 = ssub.s32 %s23, 2
      %s30 = sadd.s32 %s23, 1
      %s31 = ssub.s32 %s23, %s30
      %p32 = scmp.eq.s32.totalorder %s31, 0
      %s34 = sadd.s32 %s33, 1
      %s35 = scalar_select %p32, %s33, %s34
      %p38 = pneg %p32
      %p39 = scmp.eq.s32.totalorder %s23, 1
      %p40 = por %p38, %p39
      %p41 = scmp.ne.s32.totalorder %s33, %s36
      %p42 = scmp.eq.s32.totalorder %s23, 0
      %p43 = por %p41, %p42
      %p44 = scmp.ne.s32.totalorder %s33, %s36
      %p45 = scmp.eq.s32.totalorder %s28, 1
      %p46 = por %p44, %p45
      %p47 = scmp.ne.s32.totalorder %s36, %s37
      %p48 = scmp.eq.s32.totalorder %s28, 0
      %p49 = por %p47, %p48
      %p50 = scmp.ne.s32.totalorder %s36, %s37
      %p51 = scmp.eq.s32.totalorder %s29, 1
      %p52 = por %p50, %p51
      %p54 = scmp.ne.s32.totalorder %s37, %s53
      %p55 = scmp.eq.s32.totalorder %s29, 0
      %p56 = por %p54, %p55
      %s58 = sadd.s32 %s57, 1
      %p61 = scmp.eq.s32.totalorder %s23, 1
      %p62 = scmp.ne.s32.totalorder %s57, %s59
      %p63 = scmp.eq.s32.totalorder %s23, 0
      %p64 = por %p62, %p63
      %p65 = scmp.ne.s32.totalorder %s57, %s59
      %p66 = scmp.eq.s32.totalorder %s28, 1
      %p67 = por %p65, %p66
      %p68 = scmp.ne.s32.totalorder %s59, %s60
      %p69 = scmp.eq.s32.totalorder %s28, 0
      %p70 = por %p68, %p69
      %p71 = scmp.ne.s32.totalorder %s59, %s60
      %p72 = scmp.eq.s32.totalorder %s29, 1
      %p73 = por %p71, %p72
      %p75 = scmp.ne.s32.totalorder %s60, %s74
      %p76 = scmp.eq.s32.totalorder %s29, 0
      %p77 = por %p75, %p76
      %s79 = sadd.s32 %s78, 1
      %p82 = scmp.eq.s32.totalorder %s23, 1
      %p83 = scmp.ne.s32.totalorder %s78, %s80
      %p84 = scmp.eq.s32.totalorder %s23, 0
      %p85 = por %p83, %p84
      %p86 = scmp.ne.s32.totalorder %s78, %s80
      %p87 = scmp.eq.s32.totalorder %s28, 1
      %p88 = por %p86, %p87
      %p89 = scmp.ne.s32.totalorder %s80, %s81
      %p90 = scmp.eq.s32.totalorder %s28, 0
      %p91 = por %p89, %p90
      %p92 = scmp.ne.s32.totalorder %s80, %s81
      %p93 = scmp.eq.s32.totalorder %s29, 1
      %p94 = por %p92, %p93
      %p96 = scmp.ne.s32.totalorder %s81, %s95
      %p97 = scmp.eq.s32.totalorder %s29, 0
      %p98 = por %p96, %p97
      %s100 = sadd.s32 %s99, 1
      %p103 = scmp.eq.s32.totalorder %s23, 1
      %p104 = scmp.ne.s32.totalorder %s99, %s101
      %p105 = scmp.eq.s32.totalorder %s23, 0
      %p106 = por %p104, %p105
      %p107 = scmp.ne.s32.totalorder %s99, %s101
      %p108 = scmp.eq.s32.totalorder %s28, 1
      %p109 = por %p107, %p108
      %p110 = scmp.ne.s32.totalorder %s101, %s102
      %p111 = scmp.eq.s32.totalorder %s28, 0
      %p112 = por %p110, %p111
      %p113 = scmp.ne.s32.totalorder %s101, %s102
      %p114 = scmp.eq.s32.totalorder %s29, 1
      %p115 = por %p113, %p114
      %p117 = scmp.ne.s32.totalorder %s102, %s116
      %p118 = scmp.eq.s32.totalorder %s29, 0
      %p119 = por %p117, %p118
      %s121 = sadd.s32 %s120, 1
      %p124 = scmp.eq.s32.totalorder %s23, 1
      %p125 = scmp.ne.s32.totalorder %s120, %s122
      %p126 = scmp.eq.s32.totalorder %s23, 0
      %p127 = por %p125, %p126
      %p128 = scmp.ne.s32.totalorder %s120, %s122
      %p129 = scmp.eq.s32.totalorder %s28, 1
      %p130 = por %p128, %p129
      %p131 = scmp.ne.s32.totalorder %s122, %s123
      %p132 = scmp.eq.s32.totalorder %s28, 0
      %p133 = por %p131, %p132
      %p134 = scmp.ne.s32.totalorder %s122, %s123
      %p135 = scmp.eq.s32.totalorder %s29, 1
      %p136 = por %p134, %p135
      %p138 = scmp.ne.s32.totalorder %s123, %s137
      %p139 = scmp.eq.s32.totalorder %s29, 0
      %p140 = por %p138, %p139
      %s142 = sadd.s32 %s141, 1
      %p145 = scmp.eq.s32.totalorder %s23, 1
      %p146 = scmp.ne.s32.totalorder %s141, %s143
      %p147 = scmp.eq.s32.totalorder %s23, 0
      %p148 = por %p146, %p147
      %p149 = scmp.ne.s32.totalorder %s141, %s143
      %p150 = scmp.eq.s32.totalorder %s28, 1
      %p151 = por %p149, %p150
      %p152 = scmp.ne.s32.totalorder %s143, %s144
      %p153 = scmp.eq.s32.totalorder %s28, 0
      %p154 = por %p152, %p153
      %p155 = scmp.ne.s32.totalorder %s143, %s144
      %p156 = scmp.eq.s32.totalorder %s29, 1
      %p157 = por %p155, %p156
      %p159 = scmp.ne.s32.totalorder %s144, %s158
      %p160 = scmp.eq.s32.totalorder %s29, 0
      %p161 = por %p159, %p160
      %s163 = sadd.s32 %s162, 1
      %p166 = scmp.eq.s32.totalorder %s23, 1
      %p167 = scmp.ne.s32.totalorder %s162, %s164
      %p168 = scmp.eq.s32.totalorder %s23, 0
      %p169 = por %p167, %p168
      %p170 = scmp.ne.s32.totalorder %s162, %s164
      %p171 = scmp.eq.s32.totalorder %s28, 1
      %p172 = por %p170, %p171
      %p173 = scmp.ne.s32.totalorder %s164, %s165
      %p174 = scmp.eq.s32.totalorder %s28, 0
      %p175 = por %p173, %p174
      %p176 = scmp.ne.s32.totalorder %s164, %s165
      %p177 = scmp.eq.s32.totalorder %s29, 1
      %p178 = por %p176, %p177
      %p180 = scmp.ne.s32.totalorder %s165, %s179
      %p181 = scmp.eq.s32.totalorder %s29, 0
      %p182 = por %p180, %p181
      %s184 = sadd.s32 %s183, 1
      %p187 = scmp.eq.s32.totalorder %s23, 1
      %p188 = scmp.ne.s32.totalorder %s183, %s185
      %p189 = scmp.eq.s32.totalorder %s23, 0
      %p190 = por %p188, %p189
      %p191 = scmp.ne.s32.totalorder %s183, %s185
      %p192 = scmp.eq.s32.totalorder %s28, 1
      %p193 = por %p191, %p192
      %p194 = scmp.ne.s32.totalorder %s185, %s186
      %p195 = scmp.eq.s32.totalorder %s28, 0
      %p196 = por %p194, %p195
      %p197 = scmp.ne.s32.totalorder %s185, %s186
      %p198 = scmp.eq.s32.totalorder %s29, 1
      %p199 = por %p197, %p198
      %p201 = scmp.ne.s32.totalorder %s186, %s200
      %p202 = scmp.eq.s32.totalorder %s29, 0
      %p203 = por %p201, %p202
      %s205 = sadd.s32 %s204, 1
      %p208 = scmp.eq.s32.totalorder %s23, 1
      %p209 = scmp.ne.s32.totalorder %s204, %s206
      %p210 = scmp.eq.s32.totalorder %s23, 0
      %p211 = por %p209, %p210
      %p212 = scmp.ne.s32.totalorder %s204, %s206
      %p213 = scmp.eq.s32.totalorder %s28, 1
      %p214 = por %p212, %p213
      %p215 = scmp.ne.s32.totalorder %s206, %s207
      %p216 = scmp.eq.s32.totalorder %s28, 0
      %p217 = por %p215, %p216
      %p218 = scmp.ne.s32.totalorder %s206, %s207
      %p219 = scmp.eq.s32.totalorder %s29, 1
      %p220 = por %p218, %p219
      %p222 = scmp.ne.s32.totalorder %s207, %s221
      %p223 = scmp.eq.s32.totalorder %s29, 0
      %p224 = por %p222, %p223
      %s225 = ssub.s32 %s23, %s30
      %p226 = scmp.eq.s32.totalorder %s225, 0
      %s228 = sadd.s32 %s227, 1
      %s229 = scalar_select %p226, %s227, %s228
      %p232 = pneg %p226
      %p233 = scmp.eq.s32.totalorder %s23, 1
      %p234 = por %p232, %p233
      %p235 = scmp.ne.s32.totalorder %s227, %s230
      %p236 = scmp.eq.s32.totalorder %s23, 0
      %p237 = por %p235, %p236
      %p238 = scmp.ne.s32.totalorder %s227, %s230
      %p239 = scmp.eq.s32.totalorder %s28, 1
      %p240 = por %p238, %p239
      %p241 = scmp.ne.s32.totalorder %s230, %s231
      %p242 = scmp.eq.s32.totalorder %s28, 0
      %p243 = por %p241, %p242
      %p244 = scmp.ne.s32.totalorder %s230, %s231
      %p245 = scmp.eq.s32.totalorder %s29, 1
      %p246 = por %p244, %p245
      %p248 = scmp.ne.s32.totalorder %s231, %s247
      %p249 = scmp.eq.s32.totalorder %s29, 0
      %p250 = por %p248, %p249
      %s251 = ssub.s32 %s23, %s30
      %p252 = scmp.eq.s32.totalorder %s251, 0
      %s254 = sadd.s32 %s253, 1
      %s255 = scalar_select %p252, %s253, %s254
      %p258 = pneg %p252
      %p259 = scmp.eq.s32.totalorder %s23, 1
      %p260 = por %p258, %p259
      %p261 = scmp.ne.s32.totalorder %s253, %s256
      %p262 = scmp.eq.s32.totalorder %s23, 0
      %p263 = por %p261, %p262
      %p264 = scmp.ne.s32.totalorder %s253, %s256
      %p265 = scmp.eq.s32.totalorder %s28, 1
      %p266 = por %p264, %p265
      %p267 = scmp.ne.s32.totalorder %s256, %s257
      %p268 = scmp.eq.s32.totalorder %s28, 0
      %p269 = por %p267, %p268
      %p270 = scmp.ne.s32.totalorder %s256, %s257
      %p271 = scmp.eq.s32.totalorder %s29, 1
      %p272 = por %p270, %p271
      %p274 = scmp.ne.s32.totalorder %s257, %s273
      %p275 = scmp.eq.s32.totalorder %s29, 0
      %p276 = por %p274, %p275
      %p277 = scmp.le.s32.totalorder 1, %s23
      %p278 = scmp.lt.s32.totalorder %s23, 3
      %p279 = pnand %p277, %p278
      %p280 = pneg %p279
      // Predicated region
      $region9: #{tpu_custom_call.1} parent=5 // pred_check
        _
      $region10: #{tpu_custom_call.1} parent=5 // pred_check_branch
        %282 = sbr.rel (%p279) target = $region12
      $region11: #{tpu_custom_call.1} parent=5 // pred_region
        %s283 = ssub.s32 %s23, 1
        // Predicated region
        $region13: #{tpu_custom_call.1} parent=11 // pred_check
          %p284 = pneg %p70
        $region14: #{tpu_custom_call.1} parent=11 // pred_check_branch
          %286 = sbr.rel (%p284) target = $region16
        $region15: #{tpu_custom_call.1} parent=11 // pred_region
          _
        $region16: #{tpu_custom_call.1} parent=11 // pred_fallthru
          _
        // Predicated region
        $region17: #{tpu_custom_call.1} parent=11 // pred_check
          %p287 = pneg %p91
        $region18: #{tpu_custom_call.1} parent=11 // pred_check_branch
          %289 = sbr.rel (%p287) target = $region20
        $region19: #{tpu_custom_call.1} parent=11 // pred_region
          _
        $region20: #{tpu_custom_call.1} parent=11 // pred_fallthru
          _
        // Predicated region
        $region21: #{tpu_custom_call.1} parent=11 // pred_check
          %p290 = pneg %p112
        $region22: #{tpu_custom_call.1} parent=11 // pred_check_branch
          %292 = sbr.rel (%p290) target = $region24
        $region23: #{tpu_custom_call.1} parent=11 // pred_region
          _
        $region24: #{tpu_custom_call.1} parent=11 // pred_fallthru
          _
        // Predicated region
        $region25: #{tpu_custom_call.1} parent=11 // pred_check
          %p293 = pneg %p133
        $region26: #{tpu_custom_call.1} parent=11 // pred_check_branch
          %295 = sbr.rel (%p293) target = $region28
        $region27: #{tpu_custom_call.1} parent=11 // pred_region
          _
        $region28: #{tpu_custom_call.1} parent=11 // pred_fallthru
          _
        // Predicated region
        $region29: #{tpu_custom_call.1} parent=11 // pred_check
          %p296 = pneg %p154
        $region30: #{tpu_custom_call.1} parent=11 // pred_check_branch
          %298 = sbr.rel (%p296) target = $region32
        $region31: #{tpu_custom_call.1} parent=11 // pred_region
          _
        $region32: #{tpu_custom_call.1} parent=11 // pred_fallthru
          _
        // Predicated region
        $region33: #{tpu_custom_call.1} parent=11 // pred_check
          %p299 = pneg %p175
        $region34: #{tpu_custom_call.1} parent=11 // pred_check_branch
          %301 = sbr.rel (%p299) target = $region36
        $region35: #{tpu_custom_call.1} parent=11 // pred_region
          _
        $region36: #{tpu_custom_call.1} parent=11 // pred_fallthru
          _
        // Predicated region
        $region37: #{tpu_custom_call.1} parent=11 // pred_check
          %p302 = pneg %p196
        $region38: #{tpu_custom_call.1} parent=11 // pred_check_branch
          %304 = sbr.rel (%p302) target = $region40
        $region39: #{tpu_custom_call.1} parent=11 // pred_region
          _
        $region40: #{tpu_custom_call.1} parent=11 // pred_fallthru
          _
        // Predicated region
        $region41: #{tpu_custom_call.1} parent=11 // pred_check
          %p305 = pneg %p217
        $region42: #{tpu_custom_call.1} parent=11 // pred_check_branch
          %307 = sbr.rel (%p305) target = $region44
        $region43: #{tpu_custom_call.1} parent=11 // pred_region
          _
        $region44: #{tpu_custom_call.1} parent=11 // pred_fallthru
          _
      $region12: #{tpu_custom_call.1} parent=5 // pred_fallthru
        _
      %p308 = scmp.lt.s32.totalorder %s23, 2
      // Predicated region
      $region45: #{tpu_custom_call.1} parent=5 // pred_check
        %p309 = pneg %p308
      $region46: #{tpu_custom_call.1} parent=5 // pred_check_branch
        %311 = sbr.rel (%p309) target = $region48
      $region47: #{tpu_custom_call.1} parent=5 // pred_region
        // Predicated region
        $region49: #{tpu_custom_call.1} parent=47 // pred_check
          %p312 = pneg %p43
        $region50: #{tpu_custom_call.1} parent=47 // pred_check_branch
          %314 = sbr.rel (%p312) target = $region52
        $region51: #{tpu_custom_call.1} parent=47 // pred_region
          %p315 = scmp.lt.s32.totalorder %s23, 1
          %s316 = scalar_select %p315, %s23, 1
          %s317 = smul.addr %s316, 8
          %s318 = scalar_lea.vmem %s0, %s317
        $region52: #{tpu_custom_call.1} parent=47 // pred_fallthru
          _
      $region48: #{tpu_custom_call.1} parent=5 // pred_fallthru
        _
      %p319 = scmp.le.s32.totalorder 1, %s23
      %p320 = scmp.lt.s32.totalorder %s23, 3
      %p321 = pnand %p319, %p320
      %p322 = pneg %p321
      // Predicated region
      $region53: #{tpu_custom_call.1} parent=5 // pred_check
        _
      $region54: #{tpu_custom_call.1} parent=5 // pred_check_branch
        %324 = sbr.rel (%p321) target = $region56
      $region55: #{tpu_custom_call.1} parent=5 // pred_region
        %s325 = ssub.s32 %s23, 1
        %p326 = scmp.lt.s32.totalorder %s28, 1
        %s327 = scalar_select %p326, %s28, 1
        %s328 = smul.addr %s327, 8
        %s329 = scalar_lea.vmem %s0, %s328
        %p330 = pneg %p49
        %p331 = pneg %p46
        %p332 = pneg %p70
        %p333 = pneg %p67
        %p334 = pneg %p91
        %p335 = pneg %p88
        %p336 = pneg %p112
        %p337 = pneg %p109
        %p338 = pneg %p133
        %p339 = pneg %p130
        %p340 = pneg %p154
        %p341 = pneg %p151
        %p342 = pneg %p175
        %p343 = pneg %p172
        %p344 = pneg %p196
        %p345 = pneg %p193
        %p346 = pneg %p217
        %p347 = pneg %p214
        %p348 = pneg %p243
        %p349 = pneg %p240
        %s350 = sand.u32 %s230, 1
        %s351 = scalar_lea.sflag [#allocation3], %s350
        %s352 = sand.u32 %s230, 1
        %s353 = smul.addr %s352, 4
        %s354 = scalar_lea.vmem [#allocation2], %s353
        %p355 = pneg %p269
        %p356 = pneg %p266
        %s357 = sand.u32 %s256, 1
        %s358 = scalar_lea.sflag [#allocation5], %s357
        %s359 = sand.u32 %s256, 1
        %s360 = smul.addr %s359, 4
        %s361 = scalar_lea.vmem [#allocation4], %s360
        %p362 = scmp.lt.s32.totalorder %s28, 1
        %s363 = scalar_select %p362, %s28, 1
        %s364 = smul.addr %s363, 8
        %s365 = scalar_lea.vmem %s0, %s364
        %v367 = vld [vmem:[%s365] sm:$0xff]
        %v368 = vpack.c.bf16 %v367, %v367
        %v369 = vld [vmem:[%s1] sm:$0xff]
        %v370 = vld [vmem:[%s1 + $0x8] sm:$0xff]
        %v371 = vld [vmem:[%s1 + $0x10] sm:$0xff]
        %v372 = vld [vmem:[%s1 + $0x18] sm:$0xff]
        %v373 = vld [vmem:[%s2] sm:$0x3]
        %v375 = vlaneseq
        %v376 = vshrl.u32 %v375, 7
        %v377 = vsub.s32 0, %v376
        %v378 = vrot.slane %v373, %v377
        %v379 = vlaneseq
        %v380 = vshrl.u32 %v379, 7
        %v381 = vsub.s32 1, %v380
        %v382 = vrot.slane %v373, %v381
        %v389 = vunpack.c.l.b16 %v369
        %v390 = vunpack.c.h.b16 %v369
        %v391 = vunpack.c.l.b16 %v370
        %v392 = vunpack.c.h.b16 %v370
        %v393 = vunpack.c.l.b16 %v371
        %v394 = vunpack.c.h.b16 %v371
        %v395 = vunpack.c.l.b16 %v372
        %v396 = vunpack.c.h.b16 %v372
        %v397 = vpack.c.b16 %v391, %v389
        %v398 = vpack.c.b16 %v392, %v390
        %v399 = vpack.c.b16 %v395, %v393
        %v400 = vpack.c.b16 %v396, %v394
        %vm405 = vcmask 261120
        %v407 = vsel %vm405, %v368, 0
        %409 = vmatprep.subr.bf16.mxu0 %v398
        %410 = vmatpush1.bf16.msra.mxu0 %v397
        %411 = vmatprep.subr.bf16.mxu0 %v400
        %412 = vmatpush1.bf16.msra.mxu0 %v399
        %413 = vmatprep.subr.bf16.mxu0 0
        %414 = vmatpush1.bf16.msra.mxu0 0
        %415 = vmatprep.subr.bf16.mxu0 0
        %416 = vmatpush1.bf16.msra.mxu0 0
        %417 = vmatprep.subr.bf16.mxu0 0
        %418 = vmatpush1.bf16.msra.mxu0 0
        %419 = vmatprep.subr.bf16.mxu0 0
        %420 = vmatpush1.bf16.msra.mxu0 0
        %421 = vmatprep.subr.bf16.mxu0 0
        %422 = vmatpush1.bf16.msra.mxu0 0
        %423 = vmatprep.subr.bf16.mxu0 0
        %424 = vmatpush1.bf16.msra.mxu0 0
        %425 = vmatprep.subr.bf16.mxu0 0
        %426 = vmatpush1.bf16.msra.mxu0 0
        %427 = vmatprep.subr.bf16.mxu0 0
        %428 = vmatpush1.bf16.msra.mxu0 0
        %429 = vmatprep.subr.bf16.mxu0 0
        %430 = vmatpush1.bf16.msra.mxu0 0
        %431 = vmatprep.subr.bf16.mxu0 0
        %432 = vmatpush1.bf16.msra.mxu0 0
        %433 = vmatprep.subr.bf16.mxu0 0
        %434 = vmatpush1.bf16.msra.mxu0 0
        %435 = vmatprep.subr.bf16.mxu0 0
        %436 = vmatpush1.bf16.msra.mxu0 0
        %437 = vmatprep.subr.bf16.mxu0 0
        %438 = vmatpush1.bf16.msra.mxu0 0
        %439 = vmatprep.subr.bf16.mxu0 0
        %440 = vmatpush1.bf16.msra.mxu0 0
        %441 = vmatprep.mubr.bf16.mxu0 0
        %442 = vmatmul.mubr.bf16.gmra.mrb[0].mxu0 %v407
        %v443 = vpop.f32.mrb[0].mxu0
        %v444 = vadd.f32 %v378, %v443
        %v445 = vpop.f32.mrb[0].mxu0
        %v446 = vadd.f32 %v382, %v445
        %v447 = vpop.f32.mrb[0].mxu0
        %v448 = vpop.f32.mrb[0].mxu0
        %449 = vdwg.mxu0
        %v450 = vmax.f32 %v444, 0.0
        %v451 = vmax.f32 %v446, 0.0
        %v452 = vpack.c.bf16 %v450, %v450
        %v453 = vpack.c.bf16 %v451, %v451
        %v454 = vld [vmem:[%s3] sm:$0xf]
        %v455 = vld [vmem:[%s3 + $0x4] sm:$0xf]
        %v456 = vld [vmem:[%s3 + $0x8] sm:$0xf]
        %v457 = vld [vmem:[%s3 + $0xc] sm:$0xf]
        %v458 = vld [vmem:[%s3 + $0x10] sm:$0xf]
        %v459 = vld [vmem:[%s3 + $0x14] sm:$0xf]
        %v460 = vld [vmem:[%s3 + $0x18] sm:$0xf]
        %v461 = vld [vmem:[%s3 + $0x1c] sm:$0xf]
        %v462 = vld [vmem:[%s3 + $0x20] sm:$0xf]
        %v463 = vld [vmem:[%s3 + $0x24] sm:$0xf]
        %v464 = vld [vmem:[%s3 + $0x28] sm:$0xf]
        %v465 = vld [vmem:[%s3 + $0x2c] sm:$0xf]
        %v466 = vld [vmem:[%s3 + $0x30] sm:$0xf]
        %v467 = vld [vmem:[%s3 + $0x34] sm:$0xf]
        %v468 = vld [vmem:[%s3 + $0x38] sm:$0xf]
        %v469 = vld [vmem:[%s3 + $0x3c] sm:$0xf]
        %v470 = vld [vmem:[%s4] sm:$0x1]
        %v472 = vlaneseq
        %v473 = vshrl.u32 %v472, 7
        %v474 = vsub.s32 0, %v473
        %v475 = vrot.slane %v470, %v474
        %v493 = vunpack.c.l.b16 %v454
        %v494 = vunpack.c.l.b16 %v455
        %v495 = vunpack.c.l.b16 %v456
        %v496 = vunpack.c.l.b16 %v457
        %v497 = vunpack.c.l.b16 %v458
        %v498 = vunpack.c.l.b16 %v459
        %v499 = vunpack.c.l.b16 %v460
        %v500 = vunpack.c.l.b16 %v461
        %v501 = vunpack.c.l.b16 %v462
        %v502 = vunpack.c.l.b16 %v463
        %v503 = vunpack.c.l.b16 %v464
        %v504 = vunpack.c.l.b16 %v465
        %v505 = vunpack.c.l.b16 %v466
        %v506 = vunpack.c.l.b16 %v467
        %v507 = vunpack.c.l.b16 %v468
        %v508 = vunpack.c.l.b16 %v469
        %v509 = vpack.c.b16 %v494, %v493
        %v510 = vpack.c.b16 %v496, %v495
        %v511 = vpack.c.b16 %v498, %v497
        %v512 = vpack.c.b16 %v500, %v499
        %v513 = vpack.c.b16 %v502, %v501
        %v514 = vpack.c.b16 %v504, %v503
        %v515 = vpack.c.b16 %v506, %v505
        %v516 = vpack.c.b16 %v508, %v507
        %525 = vmatprep.subr.bf16.mxu0 0
        %526 = vmatpush1.bf16.msra.mxu0 %v509
        %527 = vmatprep.subr.bf16.mxu0 0
        %528 = vmatpush1.bf16.msra.mxu0 %v510
        %529 = vmatprep.subr.bf16.mxu0 0
        %530 = vmatpush1.bf16.msra.mxu0 %v511
        %531 = vmatprep.subr.bf16.mxu0 0
        %532 = vmatpush1.bf16.msra.mxu0 %v512
        %533 = vmatprep.subr.bf16.mxu0 0
        %534 = vmatpush1.bf16.msra.mxu0 %v513
        %535 = vmatprep.subr.bf16.mxu0 0
        %536 = vmatpush1.bf16.msra.mxu0 %v514
        %537 = vmatprep.subr.bf16.mxu0 0
        %538 = vmatpush1.bf16.msra.mxu0 %v515
        %539 = vmatprep.subr.bf16.mxu0 0
        %540 = vmatpush1.bf16.msra.mxu0 %v516
        %541 = vmatprep.subr.bf16.mxu0 0
        %542 = vmatpush1.bf16.msra.mxu0 0
        %543 = vmatprep.subr.bf16.mxu0 0
        %544 = vmatpush1.bf16.msra.mxu0 0
        %545 = vmatprep.subr.bf16.mxu0 0
        %546 = vmatpush1.bf16.msra.mxu0 0
        %547 = vmatprep.subr.bf16.mxu0 0
        %548 = vmatpush1.bf16.msra.mxu0 0
        %549 = vmatprep.subr.bf16.mxu0 0
        %550 = vmatpush1.bf16.msra.mxu0 0
        %551 = vmatprep.subr.bf16.mxu0 0
        %552 = vmatpush1.bf16.msra.mxu0 0
        %553 = vmatprep.subr.bf16.mxu0 0
        %554 = vmatpush1.bf16.msra.mxu0 0
        %555 = vmatprep.subr.bf16.mxu0 0
        %556 = vmatpush1.bf16.msra.mxu0 0
        %557 = vmatprep.mubr.bf16.mxu0 0
        %558 = vmatmul.mubr.bf16.gmra.mrb[0].mxu0 %v452
        %v559 = vpop.f32.mrb[0].mxu0
        %v560 = vadd.f32 %v475, %v559
        %v561 = vpop.f32.mrb[0].mxu0
        %v562 = vpop.f32.mrb[0].mxu0
        %v563 = vpop.f32.mrb[0].mxu0
        %564 = vdwg.mxu0
        %v565 = vld [vmem:[%s5] sm:$0xf]
        %v566 = vld [vmem:[%s5 + $0x4] sm:$0xf]
        %v567 = vld [vmem:[%s5 + $0x8] sm:$0xf]
        %v568 = vld [vmem:[%s5 + $0xc] sm:$0xf]
        %v569 = vld [vmem:[%s5 + $0x10] sm:$0xf]
        %v570 = vld [vmem:[%s5 + $0x14] sm:$0xf]
        %v571 = vld [vmem:[%s5 + $0x18] sm:$0xf]
        %v572 = vld [vmem:[%s5 + $0x1c] sm:$0xf]
        %v573 = vld [vmem:[%s5 + $0x20] sm:$0xf]
        %v574 = vld [vmem:[%s5 + $0x24] sm:$0xf]
        %v575 = vld [vmem:[%s5 + $0x28] sm:$0xf]
        %v576 = vld [vmem:[%s5 + $0x2c] sm:$0xf]
        %v577 = vld [vmem:[%s5 + $0x30] sm:$0xf]
        %v578 = vld [vmem:[%s5 + $0x34] sm:$0xf]
        %v579 = vld [vmem:[%s5 + $0x38] sm:$0xf]
        %v580 = vld [vmem:[%s5 + $0x3c] sm:$0xf]
        %v581 = vld [vmem:[%s6] sm:$0x1]
        %v583 = vlaneseq
        %v584 = vshrl.u32 %v583, 7
        %v585 = vsub.s32 0, %v584
        %v586 = vrot.slane %v581, %v585
        %v604 = vunpack.c.l.b16 %v565
        %v605 = vunpack.c.l.b16 %v566
        %v606 = vunpack.c.l.b16 %v567
        %v607 = vunpack.c.l.b16 %v568
        %v608 = vunpack.c.l.b16 %v569
        %v609 = vunpack.c.l.b16 %v570
        %v610 = vunpack.c.l.b16 %v571
        %v611 = vunpack.c.l.b16 %v572
        %v612 = vunpack.c.l.b16 %v573
        %v613 = vunpack.c.l.b16 %v574
        %v614 = vunpack.c.l.b16 %v575
        %v615 = vunpack.c.l.b16 %v576
        %v616 = vunpack.c.l.b16 %v577
        %v617 = vunpack.c.l.b16 %v578
        %v618 = vunpack.c.l.b16 %v579
        %v619 = vunpack.c.l.b16 %v580
        %v620 = vpack.c.b16 %v605, %v604
        %v621 = vpack.c.b16 %v607, %v606
        %v622 = vpack.c.b16 %v609, %v608
        %v623 = vpack.c.b16 %v611, %v610
        %v624 = vpack.c.b16 %v613, %v612
        %v625 = vpack.c.b16 %v615, %v614
        %v626 = vpack.c.b16 %v617, %v616
        %v627 = vpack.c.b16 %v619, %v618
        %636 = vmatprep.subr.bf16.mxu0 0
        %637 = vmatpush1.bf16.msra.mxu0 %v620
        %638 = vmatprep.subr.bf16.mxu0 0
        %639 = vmatpush1.bf16.msra.mxu0 %v621
        %640 = vmatprep.subr.bf16.mxu0 0
        %641 = vmatpush1.bf16.msra.mxu0 %v622
        %642 = vmatprep.subr.bf16.mxu0 0
        %643 = vmatpush1.bf16.msra.mxu0 %v623
        %644 = vmatprep.subr.bf16.mxu0 0
        %645 = vmatpush1.bf16.msra.mxu0 %v624
        %646 = vmatprep.subr.bf16.mxu0 0
        %647 = vmatpush1.bf16.msra.mxu0 %v625
        %648 = vmatprep.subr.bf16.mxu0 0
        %649 = vmatpush1.bf16.msra.mxu0 %v626
        %650 = vmatprep.subr.bf16.mxu0 0
        %651 = vmatpush1.bf16.msra.mxu0 %v627
        %652 = vmatprep.subr.bf16.mxu0 0
        %653 = vmatpush1.bf16.msra.mxu0 0
        %654 = vmatprep.subr.bf16.mxu0 0
        %655 = vmatpush1.bf16.msra.mxu0 0
        %656 = vmatprep.subr.bf16.mxu0 0
        %657 = vmatpush1.bf16.msra.mxu0 0
        %658 = vmatprep.subr.bf16.mxu0 0
        %659 = vmatpush1.bf16.msra.mxu0 0
        %660 = vmatprep.subr.bf16.mxu0 0
        %661 = vmatpush1.bf16.msra.mxu0 0
        %662 = vmatprep.subr.bf16.mxu0 0
        %663 = vmatpush1.bf16.msra.mxu0 0
        %664 = vmatprep.subr.bf16.mxu0 0
        %665 = vmatpush1.bf16.msra.mxu0 0
        %666 = vmatprep.subr.bf16.mxu0 0
        %667 = vmatpush1.bf16.msra.mxu0 0
        %668 = vmatprep.mubr.bf16.mxu0 0
        %669 = vmatmul.mubr.bf16.gmra.mrb[0].mxu0 %v453
        %v670 = vpop.f32.mrb[0].mxu0
        %v671 = vadd.f32 %v586, %v670
        %v672 = vpop.f32.mrb[0].mxu0
        %v673 = vpop.f32.mrb[0].mxu0
        %v674 = vpop.f32.mrb[0].mxu0
        %675 = vdwg.mxu0
        %v676 = vmax.f32 %v560, 0.0
        %v677 = vpack.c.bf16 %v676, %v676
        %v678 = vmax.f32 %v671, 0.0
        %v679 = vpack.c.bf16 %v678, %v678
        %v680 = vld [vmem:[%s7] sm:$0xf]
        %v681 = vld [vmem:[%s7 + $0x4] sm:$0xf]
        %v682 = vld [vmem:[%s7 + $0x8] sm:$0xf]
        %v683 = vld [vmem:[%s7 + $0xc] sm:$0xf]
        %v688 = vunpack.c.l.b16 %v680
        %v689 = vunpack.c.l.b16 %v681
        %v690 = vunpack.c.l.b16 %v682
        %v691 = vunpack.c.l.b16 %v683
        %v692 = vpack.c.b16 %v689, %v688
        %v693 = vpack.c.b16 %v691, %v690
        %v697 = vsel %vm405, %v677, 0
        %699 = vmatprep.subr.bf16.mxu0 0
        %700 = vmatpush1.bf16.msra.mxu0 %v692
        %701 = vmatprep.subr.bf16.mxu0 0
        %702 = vmatpush1.bf16.msra.mxu0 %v693
        %703 = vmatprep.subr.bf16.mxu0 0
        %704 = vmatpush1.bf16.msra.mxu0 0
        %705 = vmatprep.subr.bf16.mxu0 0
        %706 = vmatpush1.bf16.msra.mxu0 0
        %707 = vmatprep.subr.bf16.mxu0 0
        %708 = vmatpush1.bf16.msra.mxu0 0
        %709 = vmatprep.subr.bf16.mxu0 0
        %710 = vmatpush1.bf16.msra.mxu0 0
        %711 = vmatprep.subr.bf16.mxu0 0
        %712 = vmatpush1.bf16.msra.mxu0 0
        %713 = vmatprep.subr.bf16.mxu0 0
        %714 = vmatpush1.bf16.msra.mxu0 0
        %715 = vmatprep.subr.bf16.mxu0 0
        %716 = vmatpush1.bf16.msra.mxu0 0
        %717 = vmatprep.subr.bf16.mxu0 0
        %718 = vmatpush1.bf16.msra.mxu0 0
        %719 = vmatprep.subr.bf16.mxu0 0
        %720 = vmatpush1.bf16.msra.mxu0 0
        %721 = vmatprep.subr.bf16.mxu0 0
        %722 = vmatpush1.bf16.msra.mxu0 0
        %723 = vmatprep.subr.bf16.mxu0 0
        %724 = vmatpush1.bf16.msra.mxu0 0
        %725 = vmatprep.subr.bf16.mxu0 0
        %726 = vmatpush1.bf16.msra.mxu0 0
        %727 = vmatprep.subr.bf16.mxu0 0
        %728 = vmatpush1.bf16.msra.mxu0 0
        %729 = vmatprep.subr.bf16.mxu0 0
        %730 = vmatpush1.bf16.msra.mxu0 0
        %731 = vmatprep.mubr.bf16.mxu0 0
        %732 = vmatmul.mubr.bf16.gmra.mrb[0].mxu0 %v697
        %v733 = vpop.f32.mrb[0].mxu0
        %v734 = vadd.f32 0.0, %v733
        %v735 = vpop.f32.mrb[0].mxu0
        %v736 = vpop.f32.mrb[0].mxu0
        %v737 = vpop.f32.mrb[0].mxu0
        %738 = vdwg.mxu0
        %v739 = vpack.c.bf16 %v734, %v734
        %740 = vst [vmem:[%s354] sm:$0xf] %v739
        %v741 = vld [vmem:[%s8] sm:$0xf]
        %v742 = vld [vmem:[%s8 + $0x4] sm:$0xf]
        %v743 = vld [vmem:[%s8 + $0x8] sm:$0xf]
        %v744 = vld [vmem:[%s8 + $0xc] sm:$0xf]
        %v749 = vunpack.c.l.b16 %v741
        %v750 = vunpack.c.l.b16 %v742
        %v751 = vunpack.c.l.b16 %v743
        %v752 = vunpack.c.l.b16 %v744
        %v753 = vpack.c.b16 %v750, %v749
        %v754 = vpack.c.b16 %v752, %v751
        %v758 = vsel %vm405, %v679, 0
        %760 = vmatprep.subr.bf16.mxu0 0
        %761 = vmatpush1.bf16.msra.mxu0 %v753
        %762 = vmatprep.subr.bf16.mxu0 0
        %763 = vmatpush1.bf16.msra.mxu0 %v754
        %764 = vmatprep.subr.bf16.mxu0 0
        %765 = vmatpush1.bf16.msra.mxu0 0
        %766 = vmatprep.subr.bf16.mxu0 0
        %767 = vmatpush1.bf16.msra.mxu0 0
        %768 = vmatprep.subr.bf16.mxu0 0
        %769 = vmatpush1.bf16.msra.mxu0 0
        %770 = vmatprep.subr.bf16.mxu0 0
        %771 = vmatpush1.bf16.msra.mxu0 0
        %772 = vmatprep.subr.bf16.mxu0 0
        %773 = vmatpush1.bf16.msra.mxu0 0
        %774 = vmatprep.subr.bf16.mxu0 0
        %775 = vmatpush1.bf16.msra.mxu0 0
        %776 = vmatprep.subr.bf16.mxu0 0
        %777 = vmatpush1.bf16.msra.mxu0 0
        %778 = vmatprep.subr.bf16.mxu0 0
        %779 = vmatpush1.bf16.msra.mxu0 0
        %780 = vmatprep.subr.bf16.mxu0 0
        %781 = vmatpush1.bf16.msra.mxu0 0
        %782 = vmatprep.subr.bf16.mxu0 0
        %783 = vmatpush1.bf16.msra.mxu0 0
        %784 = vmatprep.subr.bf16.mxu0 0
        %785 = vmatpush1.bf16.msra.mxu0 0
        %786 = vmatprep.subr.bf16.mxu0 0
        %787 = vmatpush1.bf16.msra.mxu0 0
        %788 = vmatprep.subr.bf16.mxu0 0
        %789 = vmatpush1.bf16.msra.mxu0 0
        %790 = vmatprep.subr.bf16.mxu0 0
        %791 = vmatpush1.bf16.msra.mxu0 0
        %792 = vmatprep.mubr.bf16.mxu0 0
        %793 = vmatmul.mubr.bf16.gmra.mrb[0].mxu0 %v758
        %v794 = vpop.f32.mrb[0].mxu0
        %v795 = vadd.f32 0.0, %v794
        %v796 = vpop.f32.mrb[0].mxu0
        %v797 = vpop.f32.mrb[0].mxu0
        %v798 = vpop.f32.mrb[0].mxu0
        %799 = vdwg.mxu0
        %v800 = vpack.c.bf16 %v795, %v795
        %801 = vst [vmem:[%s361] sm:$0xf] %v800
        %s802 = sand.u32 %s230, 1
        %s803 = scalar_lea.sflag [#allocation3], %s802
        %s804 = sand.u32 %s230, 1
        %s805 = smul.addr %s804, 4
        %s806 = scalar_lea.vmem [#allocation2], %s805
        %s807 = sand.u32 %s256, 1
        %s808 = scalar_lea.sflag [#allocation5], %s807
        %s809 = sand.u32 %s256, 1
        %s810 = smul.addr %s809, 4
        %s811 = scalar_lea.vmem [#allocation4], %s810
        // Predicated region
        $region57: #{tpu_custom_call.1} parent=55 // pred_check
          %p812 = pneg %p240
        $region58: #{tpu_custom_call.1} parent=55 // pred_check_branch
          %814 = sbr.rel (%p812) target = $region60
        $region59: #{tpu_custom_call.1} parent=55 // pred_region
          %s816 = ssub.s32 64, 64
          %817 = vsyncadd %s803, %s816
          %s818 = smul.addr %s28, 64
          %s819 = scalar_lea.hbm %s9, %s818
          %s821 = sshll.u32 %s806, 4
          %s822 = int_to_ptr.vmem [resolvable:$true] %s821
          %824 = dma.vmem_to_hbm [thread:$0]  %s822, 64, %s819, %s803
        $region60: #{tpu_custom_call.1} parent=55 // pred_fallthru
          _
        // Predicated region
        $region61: #{tpu_custom_call.1} parent=55 // pred_check
          %p825 = pneg %p266
        $region62: #{tpu_custom_call.1} parent=55 // pred_check_branch
          %827 = sbr.rel (%p825) target = $region64
        $region63: #{tpu_custom_call.1} parent=55 // pred_region
          %s829 = ssub.s32 64, 64
          %830 = vsyncadd %s808, %s829
          %s831 = smul.addr %s28, 64
          %s832 = scalar_lea.hbm %s10, %s831
          %s834 = sshll.u32 %s811, 4
          %s835 = int_to_ptr.vmem [resolvable:$true] %s834
          %837 = dma.vmem_to_hbm [thread:$0]  %s835, 64, %s832, %s808
        $region64: #{tpu_custom_call.1} parent=55 // pred_fallthru
          _
      $region56: #{tpu_custom_call.1} parent=5 // pred_fallthru
        _
      %p838 = scmp.le.s32.totalorder 2, %s23
      // Predicated region
      $region65: #{tpu_custom_call.1} parent=5 // pred_check
        %p839 = pneg %p838
      $region66: #{tpu_custom_call.1} parent=5 // pred_check_branch
        %841 = sbr.rel (%p839) target = $region68
      $region67: #{tpu_custom_call.1} parent=5 // pred_region
        %s842 = ssub.s32 %s23, 2
        // Predicated region
        $region69: #{tpu_custom_call.1} parent=67 // pred_check
          %p843 = pneg %p246
        $region70: #{tpu_custom_call.1} parent=67 // pred_check_branch
          %845 = sbr.rel (%p843) target = $region72
        $region71: #{tpu_custom_call.1} parent=67 // pred_region
          %s846 = sand.u32 %s231, 1
          %s847 = scalar_lea.sflag [#allocation3], %s846
          %s848 = sand.u32 %s231, 1
          %s849 = smul.addr %s848, 4
          %s850 = scalar_lea.vmem [#allocation2], %s849
          %851 = dma.done %s847, 64
        $region72: #{tpu_custom_call.1} parent=67 // pred_fallthru
          _
        // Predicated region
        $region73: #{tpu_custom_call.1} parent=67 // pred_check
          %p852 = pneg %p272
        $region74: #{tpu_custom_call.1} parent=67 // pred_check_branch
          %854 = sbr.rel (%p852) target = $region76
        $region75: #{tpu_custom_call.1} parent=67 // pred_region
          %s855 = sand.u32 %s257, 1
          %s856 = scalar_lea.sflag [#allocation5], %s855
          %s857 = sand.u32 %s257, 1
          %s858 = smul.addr %s857, 4
          %s859 = scalar_lea.vmem [#allocation4], %s858
          %860 = dma.done %s856, 64
        $region76: #{tpu_custom_call.1} parent=67 // pred_fallthru
          _
      $region68: #{tpu_custom_call.1} parent=5 // pred_fallthru
        _
    $region6: #{tpu_custom_call.1} parent=1 // loop_footer
      %s27 = sadd.s32 1, %s23
    $region7: #{tpu_custom_call.1} parent=1 // loop_footer_branch
      %22 = sbr.rel target = $region3
    $region8: #{tpu_custom_call.1} parent=1 // loop_exit
      _
    %861 = vsyncpa [#allocation3], 1
    %s862 = scalar_lea.sflag [#allocation3], 1
    %863 = vsyncpa %s862, 1
    %864 = vsyncpa [#allocation5], 1
    %s865 = scalar_lea.sflag [#allocation5], 1
    %866 = vsyncpa %s865, 1

</llo_original>
